<compile_context>
chip_gen: v7x
topology: tpu7x:2x2x1
jax: 0.10.0
libtpu: 0.0.40
codegen_flags: <defaults>
</compile_context>

<pallas_src>
import math
import functools

import jax
import jax.numpy as jnp
from jax.experimental import pallas as pl
from jax.experimental.pallas import tpu as pltpu


# ----------------------------------------------------------------------------
# Fused multi-head attention kernel (one batch element per grid step)
# ----------------------------------------------------------------------------

def _mha_kernel(q_ref, k_ref, v_ref, m_ref,
                wq_ref, bq_ref, wk_ref, bk_ref, wv_ref, bv_ref,
                wo_ref, bo_ref, o_ref, *, n_heads, d_k, scale):
    q_in = q_ref[0]          # [Sq, D]
    k_in = k_ref[0]          # [Sk, D]
    v_in = v_ref[0]          # [Sk, D]
    mask = m_ref[0]          # [Sq, Sk] (int32; 0 == masked out)

    # Fused (all heads at once) Q/K/V projections -> [S, n_heads*d_k]
    q_all = jnp.dot(q_in, wq_ref[...], preferred_element_type=jnp.float32) + bq_ref[...]
    k_all = jnp.dot(k_in, wk_ref[...], preferred_element_type=jnp.float32) + bk_ref[...]
    v_all = jnp.dot(v_in, wv_ref[...], preferred_element_type=jnp.float32) + bv_ref[...]

    neg_big = jnp.float32(-1000000000.0)
    head_outs = []
    # n_heads is small and static -> unrolled at trace time (no kernel relaunch).
    for h in range(n_heads):
        sl = slice(h * d_k, (h + 1) * d_k)
        qh = q_all[:, sl]    # [Sq, d_k]
        kh = k_all[:, sl]    # [Sk, d_k]
        vh = v_all[:, sl]    # [Sk, d_k]

        # scores: contract last axis of q with last axis of k (no k.T / XLU transpose)
        s = jax.lax.dot_general(
            qh, kh, (((1,), (1,)), ((), ())),
            preferred_element_type=jnp.float32) * scale          # [Sq, Sk]
        s = jnp.where(mask == 0, neg_big, s)

        # numerically stable softmax over last axis (f32 throughout)
        s = s - jnp.max(s, axis=-1, keepdims=True)
        e = jnp.exp(s)
        denom = jnp.sum(e, axis=-1, keepdims=True)
        p = e * pl.reciprocal(denom, approx=True)                # EUP reciprocal

        head_outs.append(
            jnp.dot(p, vh, preferred_element_type=jnp.float32))  # [Sq, d_k]

    cat = jnp.concatenate(head_outs, axis=-1)                    # [Sq, n_heads*d_k]
    y = jnp.dot(cat, wo_ref[...], preferred_element_type=jnp.float32) + bo_ref[...]
    # TODO(synk): nn.Dropout(p=0.1) is identity here (inference / eval mode).
    o_ref[0] = y.astype(o_ref.dtype)


def multi_head_attention(params, query, key, value, mask, *, n_heads, d_k):
    """query: [B, Sq, D], key/value: [B, Sk, D], mask: [B, Sq, Sk] int32 -> [B, Sq, D]."""
    B, Sq, D = query.shape
    Sk = key.shape[1]
    Hd = n_heads * d_k
    scale = 1.0 / math.sqrt(d_k)

    kernel = functools.partial(_mha_kernel, n_heads=n_heads, d_k=d_k, scale=scale)

    return pl.pallas_call(
        kernel,
        out_shape=jax.ShapeDtypeStruct((B, Sq, D), query.dtype),
        grid=(B,),
        in_specs=[
            pl.BlockSpec((1, Sq, D), lambda b: (b, 0, 0)),   # query
            pl.BlockSpec((1, Sk, D), lambda b: (b, 0, 0)),   # key
            pl.BlockSpec((1, Sk, D), lambda b: (b, 0, 0)),   # value
            pl.BlockSpec((1, Sq, Sk), lambda b: (b, 0, 0)),  # mask (int32)
            pl.BlockSpec((D, Hd), lambda b: (0, 0)),         # Wq (all heads stacked)
            pl.BlockSpec((1, Hd), lambda b: (0, 0)),         # bq
            pl.BlockSpec((D, Hd), lambda b: (0, 0)),         # Wk
            pl.BlockSpec((1, Hd), lambda b: (0, 0)),         # bk
            pl.BlockSpec((D, Hd), lambda b: (0, 0)),         # Wv
            pl.BlockSpec((1, Hd), lambda b: (0, 0)),         # bv
            pl.BlockSpec((Hd, D), lambda b: (0, 0)),         # Wo
            pl.BlockSpec((1, D), lambda b: (0, 0)),          # bo
        ],
        out_specs=pl.BlockSpec((1, Sq, D), lambda b: (b, 0, 0)),
        compiler_params=pltpu.CompilerParams(
            dimension_semantics=("parallel",),               # shards batch across TCs (v7x)
        ),
    )(query, key, value, mask,
      params["wq"], params["bq"].reshape(1, Hd),
      params["wk"], params["bk"].reshape(1, Hd),
      params["wv"], params["bv"].reshape(1, Hd),
      params["wo"], params["bo"].reshape(1, D))


# ----------------------------------------------------------------------------
# Pure-JAX reference (mirrors the PyTorch forward) for correctness checking
# ----------------------------------------------------------------------------

def mha_reference(params, query, key, value, mask, *, n_heads, d_k):
    scale = 1.0 / math.sqrt(d_k)
    q_all = jnp.einsum("bsd,de->bse", query, params["wq"]) + params["bq"]
    k_all = jnp.einsum("bsd,de->bse", key, params["wk"]) + params["bk"]
    v_all = jnp.einsum("bsd,de->bse", value, params["wv"]) + params["bv"]
    outs = []
    for h in range(n_heads):
        sl = slice(h * d_k, (h + 1) * d_k)
        s = jnp.einsum("bqd,bkd->bqk", q_all[..., sl], k_all[..., sl]) * scale
        s = jnp.where(mask == 0, -1000000000.0, s)
        p = jax.nn.softmax(s, axis=-1)
        outs.append(jnp.einsum("bqk,bkd->bqd", p, v_all[..., sl]))
    cat = jnp.concatenate(outs, axis=-1)
    return jnp.einsum("bse,ed->bsd", cat, params["wo"]) + params["bo"]


# ----------------------------------------------------------------------------
# Parameter init (PyTorch nn.Linear-style uniform init, per-head weights
# stacked into fused [D, n_heads*d_k] matrices)
# ----------------------------------------------------------------------------

def _init_linear(key, d_in, d_out):
    kw, kb = jax.random.split(key)
    bound = 1.0 / math.sqrt(d_in)
    w = jax.random.uniform(kw, (d_in, d_out), jnp.float32, -bound, bound)
    b = jax.random.uniform(kb, (d_out,), jnp.float32, -bound, bound)
    return w, b


def init_mha_params(key, n_heads, d_model, d_k):
    keys = jax.random.split(key, 3 * n_heads + 1)
    wq, bq, wk, bk, wv, bv = [], [], [], [], [], []
    for h in range(n_heads):
        w, b = _init_linear(keys[3 * h + 0], d_model, d_k); wq.append(w); bq.append(b)
        w, b = _init_linear(keys[3 * h + 1], d_model, d_k); wk.append(w); bk.append(b)
        w, b = _init_linear(keys[3 * h + 2], d_model, d_k); wv.append(w); bv.append(b)
    wo, bo = _init_linear(keys[-1], n_heads * d_k, d_model)
    return {
        "wq": jnp.concatenate(wq, axis=1), "bq": jnp.concatenate(bq),
        "wk": jnp.concatenate(wk, axis=1), "bk": jnp.concatenate(bk),
        "wv": jnp.concatenate(wv, axis=1), "bv": jnp.concatenate(bv),
        "wo": wo, "bo": bo,
    }


# ----------------------------------------------------------------------------
# Main
# ----------------------------------------------------------------------------

if __name__ == "__main__":
    # Small but lane-dense config: d_model = n_heads * d_k = 128.
    B = 2
    Sq = 8
    Sk = 8
    n_heads = 4
    d_k = 32
    d_model = n_heads * d_k   # 128

    root = jax.random.PRNGKey(0)
    k_par, k_q, k_k, k_v = jax.random.split(root, 4)

    params = init_mha_params(k_par, n_heads, d_model, d_k)

    query = jax.random.normal(k_q, (B, Sq, d_model), jnp.float32)
    key = jax.random.normal(k_k, (B, Sk, d_model), jnp.float32)
    value = jax.random.normal(k_v, (B, Sk, d_model), jnp.float32)

    # Causal mask materialized at score shape (int32; 0 == masked position).
    mask = jnp.tril(jnp.ones((Sq, Sk), jnp.int32))[None].repeat(B, axis=0)

    out = multi_head_attention(params, query, key, value, mask,
                               n_heads=n_heads, d_k=d_k)
    out = jax.block_until_ready(out)

    ref = mha_reference(params, query, key, value, mask, n_heads=n_heads, d_k=d_k)

    assert out.shape == (B, Sq, d_model)
    assert bool(jnp.all(jnp.isfinite(out)))
    # Generous tolerance: approx EUP reciprocal in the softmax denominator.
    assert bool(jnp.allclose(out, ref, atol=2e-2, rtol=2e-2))
    print("KERNEL_OK")
</pallas_src>

<mosaic_0001>
module attributes {stable_mosaic.version = 11 : i64} {
  func.func @_mha_kernel(%arg0: i32, %arg1: memref<1x8x128xf32, #tpu.memory_space<vmem>>, %arg2: memref<1x8x128xf32, #tpu.memory_space<vmem>>, %arg3: memref<1x8x128xf32, #tpu.memory_space<vmem>>, %arg4: memref<1x8x8xi32, #tpu.memory_space<vmem>>, %arg5: memref<128x128xf32, #tpu.memory_space<vmem>>, %arg6: memref<1x128xf32, #tpu.memory_space<vmem>>, %arg7: memref<128x128xf32, #tpu.memory_space<vmem>>, %arg8: memref<1x128xf32, #tpu.memory_space<vmem>>, %arg9: memref<128x128xf32, #tpu.memory_space<vmem>>, %arg10: memref<1x128xf32, #tpu.memory_space<vmem>>, %arg11: memref<128x128xf32, #tpu.memory_space<vmem>>, %arg12: memref<1x128xf32, #tpu.memory_space<vmem>>, %arg13: memref<1x8x128xf32, #tpu.memory_space<vmem>>) attributes {dimension_semantics = [#tpu.dimension_semantics<parallel>], iteration_bounds = array<i64: 2>, scalar_prefetch = 0 : i64, scratch_operands = 0 : i64, tpu.core_type = #tpu.core_type<tc>, window_params = [{transform_indices = @transform_0, window_bounds = array<i64: 1, 8, 128>}, {transform_indices = @transform_1, window_bounds = array<i64: 1, 8, 128>}, {transform_indices = @transform_2, window_bounds = array<i64: 1, 8, 128>}, {transform_indices = @transform_3, window_bounds = array<i64: 1, 8, 8>}, {pipeline_mode = #tpu.pipeline_mode<synchronous>, transform_indices = @transform_4, window_bounds = array<i64: 128, 128>}, {pipeline_mode = #tpu.pipeline_mode<synchronous>, transform_indices = @transform_5, window_bounds = array<i64: 1, 128>}, {pipeline_mode = #tpu.pipeline_mode<synchronous>, transform_indices = @transform_6, window_bounds = array<i64: 128, 128>}, {pipeline_mode = #tpu.pipeline_mode<synchronous>, transform_indices = @transform_7, window_bounds = array<i64: 1, 128>}, {pipeline_mode = #tpu.pipeline_mode<synchronous>, transform_indices = @transform_8, window_bounds = array<i64: 128, 128>}, {pipeline_mode = #tpu.pipeline_mode<synchronous>, transform_indices = @transform_9, window_bounds = array<i64: 1, 128>}, {pipeline_mode = #tpu.pipeline_mode<synchronous>, transform_indices = @transform_10, window_bounds = array<i64: 128, 128>}, {pipeline_mode = #tpu.pipeline_mode<synchronous>, transform_indices = @transform_11, window_bounds = array<i64: 1, 128>}, {transform_indices = @transform_12, window_bounds = array<i64: 1, 8, 128>}]} {
    %c0 = arith.constant 0 : index
    %c0_0 = arith.constant 0 : index
    %c0_1 = arith.constant 0 : index
    %0 = vector.load %arg1[%c0, %c0_0, %c0_1] : memref<1x8x128xf32, #tpu.memory_space<vmem>>, vector<1x8x128xf32>
    %1 = vector.shape_cast %0 : vector<1x8x128xf32> to vector<8x128xf32>
    %c0_2 = arith.constant 0 : index
    %c0_3 = arith.constant 0 : index
    %c0_4 = arith.constant 0 : index
    %2 = vector.load %arg2[%c0_2, %c0_3, %c0_4] : memref<1x8x128xf32, #tpu.memory_space<vmem>>, vector<1x8x128xf32>
    %3 = vector.shape_cast %2 : vector<1x8x128xf32> to vector<8x128xf32>
    %c0_5 = arith.constant 0 : index
    %c0_6 = arith.constant 0 : index
    %c0_7 = arith.constant 0 : index
    %4 = vector.load %arg3[%c0_5, %c0_6, %c0_7] : memref<1x8x128xf32, #tpu.memory_space<vmem>>, vector<1x8x128xf32>
    %5 = vector.shape_cast %4 : vector<1x8x128xf32> to vector<8x128xf32>
    %c0_8 = arith.constant 0 : index
    %c0_9 = arith.constant 0 : index
    %c0_10 = arith.constant 0 : index
    %6 = vector.load %arg4[%c0_8, %c0_9, %c0_10] : memref<1x8x8xi32, #tpu.memory_space<vmem>>, vector<1x8x8xi32>
    %7 = vector.shape_cast %6 : vector<1x8x8xi32> to vector<8x8xi32>
    %c0_11 = arith.constant 0 : index
    %c0_12 = arith.constant 0 : index
    %8 = vector.load %arg5[%c0_11, %c0_12] : memref<128x128xf32, #tpu.memory_space<vmem>>, vector<128x128xf32>
    %cst = arith.constant dense<0.000000e+00> : vector<8x128xf32>
    %9 = tpu.matmul %1, %8, %cst {dimension_numbers = #tpu.dot_dimension_numbers<[1], [0], [0], [1], [0, 0, 1, 1], [], []>} : vector<8x128xf32>, vector<128x128xf32>, vector<8x128xf32> -> vector<8x128xf32>
    %c0_13 = arith.constant 0 : index
    %c0_14 = arith.constant 0 : index
    %10 = vector.load %arg6[%c0_13, %c0_14] : memref<1x128xf32, #tpu.memory_space<vmem>>, vector<1x128xf32>
    %11 = vector.broadcast %10 : vector<1x128xf32> to vector<8x128xf32>
    %12 = arith.addf %9, %11 : vector<8x128xf32>
    %c0_15 = arith.constant 0 : index
    %c0_16 = arith.constant 0 : index
    %13 = vector.load %arg7[%c0_15, %c0_16] : memref<128x128xf32, #tpu.memory_space<vmem>>, vector<128x128xf32>
    %cst_17 = arith.constant dense<0.000000e+00> : vector<8x128xf32>
    %14 = tpu.matmul %3, %13, %cst_17 {dimension_numbers = #tpu.dot_dimension_numbers<[1], [0], [0], [1], [0, 0, 1, 1], [], []>} : vector<8x128xf32>, vector<128x128xf32>, vector<8x128xf32> -> vector<8x128xf32>
    %c0_18 = arith.constant 0 : index
    %c0_19 = arith.constant 0 : index
    %15 = vector.load %arg8[%c0_18, %c0_19] : memref<1x128xf32, #tpu.memory_space<vmem>>, vector<1x128xf32>
    %16 = vector.broadcast %15 : vector<1x128xf32> to vector<8x128xf32>
    %17 = arith.addf %14, %16 : vector<8x128xf32>
    %c0_20 = arith.constant 0 : index
    %c0_21 = arith.constant 0 : index
    %18 = vector.load %arg9[%c0_20, %c0_21] : memref<128x128xf32, #tpu.memory_space<vmem>>, vector<128x128xf32>
    %cst_22 = arith.constant dense<0.000000e+00> : vector<8x128xf32>
    %19 = tpu.matmul %5, %18, %cst_22 {dimension_numbers = #tpu.dot_dimension_numbers<[1], [0], [0], [1], [0, 0, 1, 1], [], []>} : vector<8x128xf32>, vector<128x128xf32>, vector<8x128xf32> -> vector<8x128xf32>
    %c0_23 = arith.constant 0 : index
    %c0_24 = arith.constant 0 : index
    %20 = vector.load %arg10[%c0_23, %c0_24] : memref<1x128xf32, #tpu.memory_space<vmem>>, vector<1x128xf32>
    %21 = vector.broadcast %20 : vector<1x128xf32> to vector<8x128xf32>
    %22 = arith.addf %19, %21 : vector<8x128xf32>
    %23 = vector.extract_strided_slice %12 {offsets = [0, 0], sizes = [8, 32], strides = [1, 1]} : vector<8x128xf32> to vector<8x32xf32>
    %24 = vector.extract_strided_slice %17 {offsets = [0, 0], sizes = [8, 32], strides = [1, 1]} : vector<8x128xf32> to vector<8x32xf32>
    %25 = vector.extract_strided_slice %22 {offsets = [0, 0], sizes = [8, 32], strides = [1, 1]} : vector<8x128xf32> to vector<8x32xf32>
    %cst_25 = arith.constant dense<0.000000e+00> : vector<8x8xf32>
    %26 = tpu.matmul %23, %24, %cst_25 {dimension_numbers = #tpu.dot_dimension_numbers<[1], [1], [0], [0], [0, 0, 1, 0], [], []>} : vector<8x32xf32>, vector<8x32xf32>, vector<8x8xf32> -> vector<8x8xf32>
    %cst_26 = arith.constant 0.176776692 : f32
    %27 = vector.broadcast %cst_26 : f32 to vector<8x8xf32>
    %28 = arith.mulf %26, %27 : vector<8x8xf32>
    %c0_i32 = arith.constant 0 : i32
    %29 = vector.broadcast %c0_i32 : i32 to vector<8x8xi32>
    %30 = arith.cmpi eq, %7, %29 : vector<8x8xi32>
    %cst_27 = arith.constant -1.000000e+09 : f32
    %31 = vector.broadcast %cst_27 : f32 to vector<8x8xf32>
    %32 = arith.select %30, %31, %28 : vector<8x8xi1>, vector<8x8xf32>
    %cst_28 = arith.constant dense<0xFF800000> : vector<8xf32>
    %33 = vector.multi_reduction <maximumf>, %32, %cst_28 [1] : vector<8x8xf32> to vector<8xf32>
    %34 = vector.shape_cast %33 : vector<8xf32> to vector<8x1xf32>
    %35 = vector.broadcast %34 : vector<8x1xf32> to vector<8x8xf32>
    %36 = arith.subf %32, %35 : vector<8x8xf32>
    %37 = math.exp %36 : vector<8x8xf32>
    %cst_29 = arith.constant dense<0.000000e+00> : vector<8xf32>
    %38 = vector.multi_reduction <add>, %37, %cst_29 [1] : vector<8x8xf32> to vector<8xf32>
    %39 = vector.shape_cast %38 : vector<8xf32> to vector<8x1xf32>
    %40 = tpu.reciprocal %39 {approx = true} : vector<8x1xf32> -> vector<8x1xf32>
    %41 = vector.broadcast %40 : vector<8x1xf32> to vector<8x8xf32>
    %42 = arith.mulf %37, %41 : vector<8x8xf32>
    %cst_30 = arith.constant dense<0.000000e+00> : vector<8x32xf32>
    %43 = tpu.matmul %42, %25, %cst_30 {dimension_numbers = #tpu.dot_dimension_numbers<[1], [0], [0], [1], [0, 0, 1, 1], [], []>} : vector<8x8xf32>, vector<8x32xf32>, vector<8x32xf32> -> vector<8x32xf32>
    %44 = vector.extract_strided_slice %12 {offsets = [0, 32], sizes = [8, 32], strides = [1, 1]} : vector<8x128xf32> to vector<8x32xf32>
    %45 = vector.extract_strided_slice %17 {offsets = [0, 32], sizes = [8, 32], strides = [1, 1]} : vector<8x128xf32> to vector<8x32xf32>
    %46 = vector.extract_strided_slice %22 {offsets = [0, 32], sizes = [8, 32], strides = [1, 1]} : vector<8x128xf32> to vector<8x32xf32>
    %cst_31 = arith.constant dense<0.000000e+00> : vector<8x8xf32>
    %47 = tpu.matmul %44, %45, %cst_31 {dimension_numbers = #tpu.dot_dimension_numbers<[1], [1], [0], [0], [0, 0, 1, 0], [], []>} : vector<8x32xf32>, vector<8x32xf32>, vector<8x8xf32> -> vector<8x8xf32>
    %cst_32 = arith.constant 0.176776692 : f32
    %48 = vector.broadcast %cst_32 : f32 to vector<8x8xf32>
    %49 = arith.mulf %47, %48 : vector<8x8xf32>
    %c0_i32_33 = arith.constant 0 : i32
    %50 = vector.broadcast %c0_i32_33 : i32 to vector<8x8xi32>
    %51 = arith.cmpi eq, %7, %50 : vector<8x8xi32>
    %cst_34 = arith.constant -1.000000e+09 : f32
    %52 = vector.broadcast %cst_34 : f32 to vector<8x8xf32>
    %53 = arith.select %51, %52, %49 : vector<8x8xi1>, vector<8x8xf32>
    %cst_35 = arith.constant dense<0xFF800000> : vector<8xf32>
    %54 = vector.multi_reduction <maximumf>, %53, %cst_35 [1] : vector<8x8xf32> to vector<8xf32>
    %55 = vector.shape_cast %54 : vector<8xf32> to vector<8x1xf32>
    %56 = vector.broadcast %55 : vector<8x1xf32> to vector<8x8xf32>
    %57 = arith.subf %53, %56 : vector<8x8xf32>
    %58 = math.exp %57 : vector<8x8xf32>
    %cst_36 = arith.constant dense<0.000000e+00> : vector<8xf32>
    %59 = vector.multi_reduction <add>, %58, %cst_36 [1] : vector<8x8xf32> to vector<8xf32>
    %60 = vector.shape_cast %59 : vector<8xf32> to vector<8x1xf32>
    %61 = tpu.reciprocal %60 {approx = true} : vector<8x1xf32> -> vector<8x1xf32>
    %62 = vector.broadcast %61 : vector<8x1xf32> to vector<8x8xf32>
    %63 = arith.mulf %58, %62 : vector<8x8xf32>
    %cst_37 = arith.constant dense<0.000000e+00> : vector<8x32xf32>
    %64 = tpu.matmul %63, %46, %cst_37 {dimension_numbers = #tpu.dot_dimension_numbers<[1], [0], [0], [1], [0, 0, 1, 1], [], []>} : vector<8x8xf32>, vector<8x32xf32>, vector<8x32xf32> -> vector<8x32xf32>
    %65 = vector.extract_strided_slice %12 {offsets = [0, 64], sizes = [8, 32], strides = [1, 1]} : vector<8x128xf32> to vector<8x32xf32>
    %66 = vector.extract_strided_slice %17 {offsets = [0, 64], sizes = [8, 32], strides = [1, 1]} : vector<8x128xf32> to vector<8x32xf32>
    %67 = vector.extract_strided_slice %22 {offsets = [0, 64], sizes = [8, 32], strides = [1, 1]} : vector<8x128xf32> to vector<8x32xf32>
    %cst_38 = arith.constant dense<0.000000e+00> : vector<8x8xf32>
    %68 = tpu.matmul %65, %66, %cst_38 {dimension_numbers = #tpu.dot_dimension_numbers<[1], [1], [0], [0], [0, 0, 1, 0], [], []>} : vector<8x32xf32>, vector<8x32xf32>, vector<8x8xf32> -> vector<8x8xf32>
    %cst_39 = arith.constant 0.176776692 : f32
    %69 = vector.broadcast %cst_39 : f32 to vector<8x8xf32>
    %70 = arith.mulf %68, %69 : vector<8x8xf32>
    %c0_i32_40 = arith.constant 0 : i32
    %71 = vector.broadcast %c0_i32_40 : i32 to vector<8x8xi32>
    %72 = arith.cmpi eq, %7, %71 : vector<8x8xi32>
    %cst_41 = arith.constant -1.000000e+09 : f32
    %73 = vector.broadcast %cst_41 : f32 to vector<8x8xf32>
    %74 = arith.select %72, %73, %70 : vector<8x8xi1>, vector<8x8xf32>
    %cst_42 = arith.constant dense<0xFF800000> : vector<8xf32>
    %75 = vector.multi_reduction <maximumf>, %74, %cst_42 [1] : vector<8x8xf32> to vector<8xf32>
    %76 = vector.shape_cast %75 : vector<8xf32> to vector<8x1xf32>
    %77 = vector.broadcast %76 : vector<8x1xf32> to vector<8x8xf32>
    %78 = arith.subf %74, %77 : vector<8x8xf32>
    %79 = math.exp %78 : vector<8x8xf32>
    %cst_43 = arith.constant dense<0.000000e+00> : vector<8xf32>
    %80 = vector.multi_reduction <add>, %79, %cst_43 [1] : vector<8x8xf32> to vector<8xf32>
    %81 = vector.shape_cast %80 : vector<8xf32> to vector<8x1xf32>
    %82 = tpu.reciprocal %81 {approx = true} : vector<8x1xf32> -> vector<8x1xf32>
    %83 = vector.broadcast %82 : vector<8x1xf32> to vector<8x8xf32>
    %84 = arith.mulf %79, %83 : vector<8x8xf32>
    %cst_44 = arith.constant dense<0.000000e+00> : vector<8x32xf32>
    %85 = tpu.matmul %84, %67, %cst_44 {dimension_numbers = #tpu.dot_dimension_numbers<[1], [0], [0], [1], [0, 0, 1, 1], [], []>} : vector<8x8xf32>, vector<8x32xf32>, vector<8x32xf32> -> vector<8x32xf32>
    %86 = vector.extract_strided_slice %12 {offsets = [0, 96], sizes = [8, 32], strides = [1, 1]} : vector<8x128xf32> to vector<8x32xf32>
    %87 = vector.extract_strided_slice %17 {offsets = [0, 96], sizes = [8, 32], strides = [1, 1]} : vector<8x128xf32> to vector<8x32xf32>
    %88 = vector.extract_strided_slice %22 {offsets = [0, 96], sizes = [8, 32], strides = [1, 1]} : vector<8x128xf32> to vector<8x32xf32>
    %cst_45 = arith.constant dense<0.000000e+00> : vector<8x8xf32>
    %89 = tpu.matmul %86, %87, %cst_45 {dimension_numbers = #tpu.dot_dimension_numbers<[1], [1], [0], [0], [0, 0, 1, 0], [], []>} : vector<8x32xf32>, vector<8x32xf32>, vector<8x8xf32> -> vector<8x8xf32>
    %cst_46 = arith.constant 0.176776692 : f32
    %90 = vector.broadcast %cst_46 : f32 to vector<8x8xf32>
    %91 = arith.mulf %89, %90 : vector<8x8xf32>
    %c0_i32_47 = arith.constant 0 : i32
    %92 = vector.broadcast %c0_i32_47 : i32 to vector<8x8xi32>
    %93 = arith.cmpi eq, %7, %92 : vector<8x8xi32>
    %cst_48 = arith.constant -1.000000e+09 : f32
    %94 = vector.broadcast %cst_48 : f32 to vector<8x8xf32>
    %95 = arith.select %93, %94, %91 : vector<8x8xi1>, vector<8x8xf32>
    %cst_49 = arith.constant dense<0xFF800000> : vector<8xf32>
    %96 = vector.multi_reduction <maximumf>, %95, %cst_49 [1] : vector<8x8xf32> to vector<8xf32>
    %97 = vector.shape_cast %96 : vector<8xf32> to vector<8x1xf32>
    %98 = vector.broadcast %97 : vector<8x1xf32> to vector<8x8xf32>
    %99 = arith.subf %95, %98 : vector<8x8xf32>
    %100 = math.exp %99 : vector<8x8xf32>
    %cst_50 = arith.constant dense<0.000000e+00> : vector<8xf32>
    %101 = vector.multi_reduction <add>, %100, %cst_50 [1] : vector<8x8xf32> to vector<8xf32>
    %102 = vector.shape_cast %101 : vector<8xf32> to vector<8x1xf32>
    %103 = tpu.reciprocal %102 {approx = true} : vector<8x1xf32> -> vector<8x1xf32>
    %104 = vector.broadcast %103 : vector<8x1xf32> to vector<8x8xf32>
    %105 = arith.mulf %100, %104 : vector<8x8xf32>
    %cst_51 = arith.constant dense<0.000000e+00> : vector<8x32xf32>
    %106 = tpu.matmul %105, %88, %cst_51 {dimension_numbers = #tpu.dot_dimension_numbers<[1], [0], [0], [1], [0, 0, 1, 1], [], []>} : vector<8x8xf32>, vector<8x32xf32>, vector<8x32xf32> -> vector<8x32xf32>
    %107 = tpu.concatenate %43, %64, %85, %106 in 1 : vector<8x32xf32>, vector<8x32xf32>, vector<8x32xf32>, vector<8x32xf32> -> vector<8x128xf32>
    %c0_52 = arith.constant 0 : index
    %c0_53 = arith.constant 0 : index
    %108 = vector.load %arg11[%c0_52, %c0_53] : memref<128x128xf32, #tpu.memory_space<vmem>>, vector<128x128xf32>
    %cst_54 = arith.constant dense<0.000000e+00> : vector<8x128xf32>
    %109 = tpu.matmul %107, %108, %cst_54 {dimension_numbers = #tpu.dot_dimension_numbers<[1], [0], [0], [1], [0, 0, 1, 1], [], []>} : vector<8x128xf32>, vector<128x128xf32>, vector<8x128xf32> -> vector<8x128xf32>
    %c0_55 = arith.constant 0 : index
    %c0_56 = arith.constant 0 : index
    %110 = vector.load %arg12[%c0_55, %c0_56] : memref<1x128xf32, #tpu.memory_space<vmem>>, vector<1x128xf32>
    %111 = vector.broadcast %110 : vector<1x128xf32> to vector<8x128xf32>
    %112 = arith.addf %109, %111 : vector<8x128xf32>
    %c0_57 = arith.constant 0 : index
    %c0_58 = arith.constant 0 : index
    %c0_59 = arith.constant 0 : index
    %113 = vector.load %arg13[%c0_57, %c0_58, %c0_59] : memref<1x8x128xf32, #tpu.memory_space<vmem>>, vector<1x8x128xf32>
    %114 = vector.shape_cast %113 : vector<1x8x128xf32> to vector<8x128xf32>
    %115 = vector.shape_cast %112 : vector<8x128xf32> to vector<1x8x128xf32>
    tpu.vector_store %arg13[%c0_57, %c0_58, %c0_59], %115 {strides = array<i32>} : memref<1x8x128xf32, #tpu.memory_space<vmem>>, vector<1x8x128xf32>,
    return
  }
  func.func @transform_0(%arg0: i32) -> (i32, i32, i32) {
    %c0_i32 = arith.constant 0 : i32
    %c0_i32_0 = arith.constant 0 : i32
    %c0_i32_1 = arith.constant 0 : i32
    return %arg0, %c0_i32, %c0_i32_0 : i32, i32, i32
  }
  func.func @transform_1(%arg0: i32) -> (i32, i32, i32) {
    %c0_i32 = arith.constant 0 : i32
    %c0_i32_0 = arith.constant 0 : i32
    %c0_i32_1 = arith.constant 0 : i32
    return %arg0, %c0_i32, %c0_i32_0 : i32, i32, i32
  }
  func.func @transform_2(%arg0: i32) -> (i32, i32, i32) {
    %c0_i32 = arith.constant 0 : i32
    %c0_i32_0 = arith.constant 0 : i32
    %c0_i32_1 = arith.constant 0 : i32
    return %arg0, %c0_i32, %c0_i32_0 : i32, i32, i32
  }
  func.func @transform_3(%arg0: i32) -> (i32, i32, i32) {
    %c0_i32 = arith.constant 0 : i32
    %c0_i32_0 = arith.constant 0 : i32
    %c0_i32_1 = arith.constant 0 : i32
    return %arg0, %c0_i32, %c0_i32_0 : i32, i32, i32
  }
  func.func @transform_4(%arg0: i32) -> (i32, i32) {
    %c0_i32 = arith.constant 0 : i32
    %c0_i32_0 = arith.constant 0 : i32
    %c0_i32_1 = arith.constant 0 : i32
    return %c0_i32, %c0_i32_0 : i32, i32
  }
  func.func @transform_5(%arg0: i32) -> (i32, i32) {
    %c0_i32 = arith.constant 0 : i32
    %c0_i32_0 = arith.constant 0 : i32
    %c0_i32_1 = arith.constant 0 : i32
    return %c0_i32, %c0_i32_0 : i32, i32
  }
  func.func @transform_6(%arg0: i32) -> (i32, i32) {
    %c0_i32 = arith.constant 0 : i32
    %c0_i32_0 = arith.constant 0 : i32
    %c0_i32_1 = arith.constant 0 : i32
    return %c0_i32, %c0_i32_0 : i32, i32
  }
  func.func @transform_7(%arg0: i32) -> (i32, i32) {
    %c0_i32 = arith.constant 0 : i32
    %c0_i32_0 = arith.constant 0 : i32
    %c0_i32_1 = arith.constant 0 : i32
    return %c0_i32, %c0_i32_0 : i32, i32
  }
  func.func @transform_8(%arg0: i32) -> (i32, i32) {
    %c0_i32 = arith.constant 0 : i32
    %c0_i32_0 = arith.constant 0 : i32
    %c0_i32_1 = arith.constant 0 : i32
    return %c0_i32, %c0_i32_0 : i32, i32
  }
  func.func @transform_9(%arg0: i32) -> (i32, i32) {
    %c0_i32 = arith.constant 0 : i32
    %c0_i32_0 = arith.constant 0 : i32
    %c0_i32_1 = arith.constant 0 : i32
    return %c0_i32, %c0_i32_0 : i32, i32
  }
  func.func @transform_10(%arg0: i32) -> (i32, i32) {
    %c0_i32 = arith.constant 0 : i32
    %c0_i32_0 = arith.constant 0 : i32
    %c0_i32_1 = arith.constant 0 : i32
    return %c0_i32, %c0_i32_0 : i32, i32
  }
  func.func @transform_11(%arg0: i32) -> (i32, i32) {
    %c0_i32 = arith.constant 0 : i32
    %c0_i32_0 = arith.constant 0 : i32
    %c0_i32_1 = arith.constant 0 : i32
    return %c0_i32, %c0_i32_0 : i32, i32
  }
  func.func @transform_12(%arg0: i32) -> (i32, i32, i32) {
    %c0_i32 = arith.constant 0 : i32
    %c0_i32_0 = arith.constant 0 : i32
    %c0_i32_1 = arith.constant 0 : i32
    return %arg0, %c0_i32, %c0_i32_0 : i32, i32, i32
  }
}

</mosaic_0001>

<llo_original>
// kernel: tpu_custom_call.1
$region0: #{tpu_custom_call.1}
  #allocation0 [shape = 'u32[]', space=smem, size = 0x4, offset = 0x4, fixed_abs, tag = 'smem constant byte address 0x4 - core index']
  #allocation1 [shape = 'u32[144,128]{1,0:T(1,128)}', space=vmem, size = 0x12000, scoped, tag = 'internal scratch']
  %s0 = inlined_call_operand.hbm [shape: f32[2,8,128], index: 0, kind: input, shape index: {}]
  %s1 = inlined_call_operand.hbm [shape: f32[2,8,128], index: 1, kind: input, shape index: {}]
  %s2 = inlined_call_operand.hbm [shape: f32[2,8,128], index: 2, kind: input, shape index: {}]
  %s3 = inlined_call_operand.hbm [shape: s32[2,8,8], index: 3, kind: input, shape index: {}]
  %s4 = inlined_call_operand.hbm [shape: f32[128,128], index: 4, kind: input, shape index: {}]
  %s5 = inlined_call_operand.vmem [shape: f32[1,128], index: 5, kind: input, shape index: {}]
  %s6 = inlined_call_operand.hbm [shape: f32[128,128], index: 6, kind: input, shape index: {}]
  %s7 = inlined_call_operand.vmem [shape: f32[1,128], index: 7, kind: input, shape index: {}]
  %s8 = inlined_call_operand.hbm [shape: f32[128,128], index: 8, kind: input, shape index: {}]
  %s9 = inlined_call_operand.vmem [shape: f32[1,128], index: 9, kind: input, shape index: {}]
  %s10 = inlined_call_operand.hbm [shape: f32[128,128], index: 10, kind: input, shape index: {}]
  %s11 = inlined_call_operand.vmem [shape: f32[1,128], index: 11, kind: input, shape index: {}]
  %s12 = inlined_call_operand.hbm [shape: f32[2,8,128], index: 12, kind: output, shape index: {}]
  %s13 = sld [smem:[#allocation0]]
  $region113: #{tpu_custom_call.1} parent=0
    _
  %s15 = ssub.s32 1, %s13
  %s16 = scalar_select 0, %s15, %s13
  $region1: #{tpu_custom_call.1} parent=0
    #allocation2 [shape = 'u8[8192]{0}', space=vmem, size = 0x2000, scoped, tag = 'input window, operand 0']
    #allocation3 [shape = 's32[2]{0}', space=sflag, size = 0x8, scoped, tag = 'scoped memory for tpu_custom_call.1']
    #allocation4 [shape = 's32[2]{0}', space=sflag, size = 0x8, scoped, tag = 'scoped memory for tpu_custom_call.1']
    #allocation5 [shape = 'u8[8192]{0}', space=vmem, size = 0x2000, scoped, tag = 'input window, operand 1']
    #allocation6 [shape = 's32[2]{0}', space=sflag, size = 0x8, scoped, tag = 'scoped memory for tpu_custom_call.1']
    #allocation7 [shape = 'u8[8192]{0}', space=vmem, size = 0x2000, scoped, tag = 'input window, operand 2']
    #allocation8 [shape = 'u8[8192]{0}', space=vmem, size = 0x2000, scoped, tag = 'input window, operand 3']
    #allocation9 [shape = 's32[2]{0}', space=sflag, size = 0x8, scoped, tag = 'scoped memory for tpu_custom_call.1']
    #allocation10 [shape = 'u8[65536]{0}', space=vmem, size = 0x10000, scoped, tag = 'input window, operand 4, single buffered']
    #allocation11 [shape = 'u8[65536]{0}', space=vmem, size = 0x10000, scoped, tag = 'input window, operand 6, single buffered']
    #allocation12 [shape = 's32[1]{0}', space=sflag, size = 0x4, scoped, tag = 'scoped memory for tpu_custom_call.1']
    #allocation13 [shape = 'u8[65536]{0}', space=vmem, size = 0x10000, scoped, tag = 'input window, operand 8, single buffered']
    #allocation14 [shape = 'u8[65536]{0}', space=vmem, size = 0x10000, scoped, tag = 'input window, operand 10, single buffered']
    #allocation15 [shape = 's32[1]{0}', space=sflag, size = 0x4, scoped, tag = 'scoped memory for tpu_custom_call.1']
    #allocation16 [shape = 'u8[8192]{0}', space=vmem, size = 0x2000, scoped, tag = 'output window, operand 0']
    %17 = vsyncpa [#allocation3], 0
    %s18 = scalar_lea.sflag [#allocation3], 1
    %19 = vsyncpa %s18, 0
    %20 = vsyncpa [#allocation6], 0
    %s21 = scalar_lea.sflag [#allocation6], 1
    %22 = vsyncpa %s21, 0
    %23 = vsyncpa [#allocation9], 0
    %s24 = scalar_lea.sflag [#allocation9], 1
    %25 = vsyncpa %s24, 0
    %26 = vsyncpa [#allocation12], 0
    %27 = vsyncpa [#allocation15], 0
    %28 = vsyncpa [#allocation4], 0
    %s29 = scalar_lea.sflag [#allocation4], 1
    %30 = vsyncpa %s29, 0
    loop: start=0, step=1, limit=4
    $region2: #{tpu_custom_call.1} parent=1 // loop_pre_header
      _
    $region3: #{tpu_custom_call.1} parent=1 // loop_header
      %s32 = sphi 0, %s36
      %p33 = scmp.ge.s32.totalorder %s32, 4
      %s42 = sphi 0, %s44
      %s45 = sphi 0, %s42
      %s46 = sphi 0, %s45
      %s62 = sphi 0, %s46
      %s68 = sphi 0, %s70
      %s71 = sphi 0, %s68
      %s72 = sphi 0, %s71
      %s88 = sphi 0, %s72
      %s94 = sphi 0, %s96
      %s97 = sphi 0, %s94
      %s98 = sphi 0, %s97
      %s114 = sphi 0, %s98
      %s120 = sphi 0, %s122
      %s123 = sphi 0, %s120
      %s124 = sphi 0, %s123
      %s140 = sphi 0, %s124
      %s144 = sphi 0, %s144
      %s146 = sphi 0, %s144
      %s147 = sphi 0, %s146
      %s161 = sphi 0, %s147
      %s165 = sphi 0, %s165
      %s167 = sphi 0, %s165
      %s168 = sphi 0, %s167
      %s182 = sphi 0, %s168
      %s186 = sphi 0, %s186
      %s188 = sphi 0, %s186
      %s189 = sphi 0, %s188
      %s203 = sphi 0, %s189
      %s207 = sphi 0, %s207
      %s209 = sphi 0, %s207
      %s210 = sphi 0, %s209
      %s224 = sphi 0, %s210
      %s228 = sphi 0, %s228
      %s230 = sphi 0, %s228
      %s231 = sphi 0, %s230
      %s245 = sphi 0, %s231
      %s249 = sphi 0, %s249
      %s251 = sphi 0, %s249
      %s252 = sphi 0, %s251
      %s266 = sphi 0, %s252
      %s270 = sphi 0, %s270
      %s272 = sphi 0, %s270
      %s273 = sphi 0, %s272
      %s287 = sphi 0, %s273
      %s291 = sphi 0, %s291
      %s293 = sphi 0, %s291
      %s294 = sphi 0, %s293
      %s308 = sphi 0, %s294
      %s314 = sphi 0, %s316
      %s317 = sphi 0, %s314
      %s318 = sphi 0, %s317
      %s334 = sphi 0, %s318
    $region4: #{tpu_custom_call.1} parent=1 // loop_header_branch
      %35 = sbr.rel (%p33) target = $region8
    $region5: #{tpu_custom_call.1} parent=1 // loop_body
      %s37 = ssub.s32 %s32, 1
      %s38 = ssub.s32 %s32, 2
      %s39 = sadd.s32 %s32, 1
      %s40 = ssub.s32 %s32, %s39
      %p41 = scmp.eq.s32.totalorder %s40, 0
      %s43 = sadd.s32 %s42, 1
      %s44 = scalar_select %p41, %s42, %s43
      %p47 = pneg %p41
      %p48 = scmp.eq.s32.totalorder %s32, 1
      %p49 = por %p47, %p48
      %p50 = scmp.ne.s32.totalorder %s42, %s45
      %p51 = scmp.eq.s32.totalorder %s32, 0
      %p52 = por %p50, %p51
      %p53 = scmp.ne.s32.totalorder %s42, %s45
      %p54 = scmp.eq.s32.totalorder %s37, 1
      %p55 = por %p53, %p54
      %p56 = scmp.ne.s32.totalorder %s45, %s46
      %p57 = scmp.eq.s32.totalorder %s37, 0
      %p58 = por %p56, %p57
      %p59 = scmp.ne.s32.totalorder %s45, %s46
      %p60 = scmp.eq.s32.totalorder %s38, 1
      %p61 = por %p59, %p60
      %p63 = scmp.ne.s32.totalorder %s46, %s62
      %p64 = scmp.eq.s32.totalorder %s38, 0
      %p65 = por %p63, %p64
      %s66 = ssub.s32 %s32, %s39
      %p67 = scmp.eq.s32.totalorder %s66, 0
      %s69 = sadd.s32 %s68, 1
      %s70 = scalar_select %p67, %s68, %s69
      %p73 = pneg %p67
      %p74 = scmp.eq.s32.totalorder %s32, 1
      %p75 = por %p73, %p74
      %p76 = scmp.ne.s32.totalorder %s68, %s71
      %p77 = scmp.eq.s32.totalorder %s32, 0
      %p78 = por %p76, %p77
      %p79 = scmp.ne.s32.totalorder %s68, %s71
      %p80 = scmp.eq.s32.totalorder %s37, 1
      %p81 = por %p79, %p80
      %p82 = scmp.ne.s32.totalorder %s71, %s72
      %p83 = scmp.eq.s32.totalorder %s37, 0
      %p84 = por %p82, %p83
      %p85 = scmp.ne.s32.totalorder %s71, %s72
      %p86 = scmp.eq.s32.totalorder %s38, 1
      %p87 = por %p85, %p86
      %p89 = scmp.ne.s32.totalorder %s72, %s88
      %p90 = scmp.eq.s32.totalorder %s38, 0
      %p91 = por %p89, %p90
      %s92 = ssub.s32 %s32, %s39
      %p93 = scmp.eq.s32.totalorder %s92, 0
      %s95 = sadd.s32 %s94, 1
      %s96 = scalar_select %p93, %s94, %s95
      %p99 = pneg %p93
      %p100 = scmp.eq.s32.totalorder %s32, 1
      %p101 = por %p99, %p100
      %p102 = scmp.ne.s32.totalorder %s94, %s97
      %p103 = scmp.eq.s32.totalorder %s32, 0
      %p104 = por %p102, %p103
      %p105 = scmp.ne.s32.totalorder %s94, %s97
      %p106 = scmp.eq.s32.totalorder %s37, 1
      %p107 = por %p105, %p106
      %p108 = scmp.ne.s32.totalorder %s97, %s98
      %p109 = scmp.eq.s32.totalorder %s37, 0
      %p110 = por %p108, %p109
      %p111 = scmp.ne.s32.totalorder %s97, %s98
      %p112 = scmp.eq.s32.totalorder %s38, 1
      %p113 = por %p111, %p112
      %p115 = scmp.ne.s32.totalorder %s98, %s114
      %p116 = scmp.eq.s32.totalorder %s38, 0
      %p117 = por %p115, %p116
      %s118 = ssub.s32 %s32, %s39
      %p119 = scmp.eq.s32.totalorder %s118, 0
      %s121 = sadd.s32 %s120, 1
      %s122 = scalar_select %p119, %s120, %s121
      %p125 = pneg %p119
      %p126 = scmp.eq.s32.totalorder %s32, 1
      %p127 = por %p125, %p126
      %p128 = scmp.ne.s32.totalorder %s120, %s123
      %p129 = scmp.eq.s32.totalorder %s32, 0
      %p130 = por %p128, %p129
      %p131 = scmp.ne.s32.totalorder %s120, %s123
      %p132 = scmp.eq.s32.totalorder %s37, 1
      %p133 = por %p131, %p132
      %p134 = scmp.ne.s32.totalorder %s123, %s124
      %p135 = scmp.eq.s32.totalorder %s37, 0
      %p136 = por %p134, %p135
      %p137 = scmp.ne.s32.totalorder %s123, %s124
      %p138 = scmp.eq.s32.totalorder %s38, 1
      %p139 = por %p137, %p138
      %p141 = scmp.ne.s32.totalorder %s124, %s140
      %p142 = scmp.eq.s32.totalorder %s38, 0
      %p143 = por %p141, %p142
      %s145 = sadd.s32 %s144, 1
      %p148 = scmp.eq.s32.totalorder %s32, 1
      %p149 = scmp.ne.s32.totalorder %s144, %s146
      %p150 = scmp.eq.s32.totalorder %s32, 0
      %p151 = por %p149, %p150
      %p152 = scmp.ne.s32.totalorder %s144, %s146
      %p153 = scmp.eq.s32.totalorder %s37, 1
      %p154 = por %p152, %p153
      %p155 = scmp.ne.s32.totalorder %s146, %s147
      %p156 = scmp.eq.s32.totalorder %s37, 0
      %p157 = por %p155, %p156
      %p158 = scmp.ne.s32.totalorder %s146, %s147
      %p159 = scmp.eq.s32.totalorder %s38, 1
      %p160 = por %p158, %p159
      %p162 = scmp.ne.s32.totalorder %s147, %s161
      %p163 = scmp.eq.s32.totalorder %s38, 0
      %p164 = por %p162, %p163
      %s166 = sadd.s32 %s165, 1
      %p169 = scmp.eq.s32.totalorder %s32, 1
      %p170 = scmp.ne.s32.totalorder %s165, %s167
      %p171 = scmp.eq.s32.totalorder %s32, 0
      %p172 = por %p170, %p171
      %p173 = scmp.ne.s32.totalorder %s165, %s167
      %p174 = scmp.eq.s32.totalorder %s37, 1
      %p175 = por %p173, %p174
      %p176 = scmp.ne.s32.totalorder %s167, %s168
      %p177 = scmp.eq.s32.totalorder %s37, 0
      %p178 = por %p176, %p177
      %p179 = scmp.ne.s32.totalorder %s167, %s168
      %p180 = scmp.eq.s32.totalorder %s38, 1
      %p181 = por %p179, %p180
      %p183 = scmp.ne.s32.totalorder %s168, %s182
      %p184 = scmp.eq.s32.totalorder %s38, 0
      %p185 = por %p183, %p184
      %s187 = sadd.s32 %s186, 1
      %p190 = scmp.eq.s32.totalorder %s32, 1
      %p191 = scmp.ne.s32.totalorder %s186, %s188
      %p192 = scmp.eq.s32.totalorder %s32, 0
      %p193 = por %p191, %p192
      %p194 = scmp.ne.s32.totalorder %s186, %s188
      %p195 = scmp.eq.s32.totalorder %s37, 1
      %p196 = por %p194, %p195
      %p197 = scmp.ne.s32.totalorder %s188, %s189
      %p198 = scmp.eq.s32.totalorder %s37, 0
      %p199 = por %p197, %p198
      %p200 = scmp.ne.s32.totalorder %s188, %s189
      %p201 = scmp.eq.s32.totalorder %s38, 1
      %p202 = por %p200, %p201
      %p204 = scmp.ne.s32.totalorder %s189, %s203
      %p205 = scmp.eq.s32.totalorder %s38, 0
      %p206 = por %p204, %p205
      %s208 = sadd.s32 %s207, 1
      %p211 = scmp.eq.s32.totalorder %s32, 1
      %p212 = scmp.ne.s32.totalorder %s207, %s209
      %p213 = scmp.eq.s32.totalorder %s32, 0
      %p214 = por %p212, %p213
      %p215 = scmp.ne.s32.totalorder %s207, %s209
      %p216 = scmp.eq.s32.totalorder %s37, 1
      %p217 = por %p215, %p216
      %p218 = scmp.ne.s32.totalorder %s209, %s210
      %p219 = scmp.eq.s32.totalorder %s37, 0
      %p220 = por %p218, %p219
      %p221 = scmp.ne.s32.totalorder %s209, %s210
      %p222 = scmp.eq.s32.totalorder %s38, 1
      %p223 = por %p221, %p222
      %p225 = scmp.ne.s32.totalorder %s210, %s224
      %p226 = scmp.eq.s32.totalorder %s38, 0
      %p227 = por %p225, %p226
      %s229 = sadd.s32 %s228, 1
      %p232 = scmp.eq.s32.totalorder %s32, 1
      %p233 = scmp.ne.s32.totalorder %s228, %s230
      %p234 = scmp.eq.s32.totalorder %s32, 0
      %p235 = por %p233, %p234
      %p236 = scmp.ne.s32.totalorder %s228, %s230
      %p237 = scmp.eq.s32.totalorder %s37, 1
      %p238 = por %p236, %p237
      %p239 = scmp.ne.s32.totalorder %s230, %s231
      %p240 = scmp.eq.s32.totalorder %s37, 0
      %p241 = por %p239, %p240
      %p242 = scmp.ne.s32.totalorder %s230, %s231
      %p243 = scmp.eq.s32.totalorder %s38, 1
      %p244 = por %p242, %p243
      %p246 = scmp.ne.s32.totalorder %s231, %s245
      %p247 = scmp.eq.s32.totalorder %s38, 0
      %p248 = por %p246, %p247
      %s250 = sadd.s32 %s249, 1
      %p253 = scmp.eq.s32.totalorder %s32, 1
      %p254 = scmp.ne.s32.totalorder %s249, %s251
      %p255 = scmp.eq.s32.totalorder %s32, 0
      %p256 = por %p254, %p255
      %p257 = scmp.ne.s32.totalorder %s249, %s251
      %p258 = scmp.eq.s32.totalorder %s37, 1
      %p259 = por %p257, %p258
      %p260 = scmp.ne.s32.totalorder %s251, %s252
      %p261 = scmp.eq.s32.totalorder %s37, 0
      %p262 = por %p260, %p261
      %p263 = scmp.ne.s32.totalorder %s251, %s252
      %p264 = scmp.eq.s32.totalorder %s38, 1
      %p265 = por %p263, %p264
      %p267 = scmp.ne.s32.totalorder %s252, %s266
      %p268 = scmp.eq.s32.totalorder %s38, 0
      %p269 = por %p267, %p268
      %s271 = sadd.s32 %s270, 1
      %p274 = scmp.eq.s32.totalorder %s32, 1
      %p275 = scmp.ne.s32.totalorder %s270, %s272
      %p276 = scmp.eq.s32.totalorder %s32, 0
      %p277 = por %p275, %p276
      %p278 = scmp.ne.s32.totalorder %s270, %s272
      %p279 = scmp.eq.s32.totalorder %s37, 1
      %p280 = por %p278, %p279
      %p281 = scmp.ne.s32.totalorder %s272, %s273
      %p282 = scmp.eq.s32.totalorder %s37, 0
      %p283 = por %p281, %p282
      %p284 = scmp.ne.s32.totalorder %s272, %s273
      %p285 = scmp.eq.s32.totalorder %s38, 1
      %p286 = por %p284, %p285
      %p288 = scmp.ne.s32.totalorder %s273, %s287
      %p289 = scmp.eq.s32.totalorder %s38, 0
      %p290 = por %p288, %p289
      %s292 = sadd.s32 %s291, 1
      %p295 = scmp.eq.s32.totalorder %s32, 1
      %p296 = scmp.ne.s32.totalorder %s291, %s293
      %p297 = scmp.eq.s32.totalorder %s32, 0
      %p298 = por %p296, %p297
      %p299 = scmp.ne.s32.totalorder %s291, %s293
      %p300 = scmp.eq.s32.totalorder %s37, 1
      %p301 = por %p299, %p300
      %p302 = scmp.ne.s32.totalorder %s293, %s294
      %p303 = scmp.eq.s32.totalorder %s37, 0
      %p304 = por %p302, %p303
      %p305 = scmp.ne.s32.totalorder %s293, %s294
      %p306 = scmp.eq.s32.totalorder %s38, 1
      %p307 = por %p305, %p306
      %p309 = scmp.ne.s32.totalorder %s294, %s308
      %p310 = scmp.eq.s32.totalorder %s38, 0
      %p311 = por %p309, %p310
      %s312 = ssub.s32 %s32, %s39
      %p313 = scmp.eq.s32.totalorder %s312, 0
      %s315 = sadd.s32 %s314, 1
      %s316 = scalar_select %p313, %s314, %s315
      %p319 = pneg %p313
      %p320 = scmp.eq.s32.totalorder %s32, 1
      %p321 = por %p319, %p320
      %p322 = scmp.ne.s32.totalorder %s314, %s317
      %p323 = scmp.eq.s32.totalorder %s32, 0
      %p324 = por %p322, %p323
      %p325 = scmp.ne.s32.totalorder %s314, %s317
      %p326 = scmp.eq.s32.totalorder %s37, 1
      %p327 = por %p325, %p326
      %p328 = scmp.ne.s32.totalorder %s317, %s318
      %p329 = scmp.eq.s32.totalorder %s37, 0
      %p330 = por %p328, %p329
      %p331 = scmp.ne.s32.totalorder %s317, %s318
      %p332 = scmp.eq.s32.totalorder %s38, 1
      %p333 = por %p331, %p332
      %p335 = scmp.ne.s32.totalorder %s318, %s334
      %p336 = scmp.eq.s32.totalorder %s38, 0
      %p337 = por %p335, %p336
      %p338 = scmp.le.s32.totalorder 1, %s32
      %p339 = scmp.lt.s32.totalorder %s32, 3
      %p340 = pnand %p338, %p339
      %p341 = pneg %p340
      // Predicated region
      $region9: #{tpu_custom_call.1} parent=5 // pred_check
        _
      $region10: #{tpu_custom_call.1} parent=5 // pred_check_branch
        %343 = sbr.rel (%p340) target = $region12
      $region11: #{tpu_custom_call.1} parent=5 // pred_region
        %s344 = ssub.s32 %s32, 1
        // Predicated region
        $region13: #{tpu_custom_call.1} parent=11 // pred_check
          %p345 = pneg %p157
        $region14: #{tpu_custom_call.1} parent=11 // pred_check_branch
          %347 = sbr.rel (%p345) target = $region16
        $region15: #{tpu_custom_call.1} parent=11 // pred_region
          %s349 = ssub.s32 2048, 2048
          %350 = vsyncadd [#allocation9], %s349
          %s351 = sshll.u32 [#allocation10], 4
          %s352 = int_to_ptr.vmem [resolvable:$true] %s351
          %357 = dma.hbm_to_vmem [thread:$0]  %s4, 2048, %s352, [#allocation9], 128, 128, 8
        $region16: #{tpu_custom_call.1} parent=11 // pred_fallthru
          _
        // Predicated region
        $region17: #{tpu_custom_call.1} parent=11 // pred_check
          %p358 = pneg %p178
        $region18: #{tpu_custom_call.1} parent=11 // pred_check_branch
          %360 = sbr.rel (%p358) target = $region20
        $region19: #{tpu_custom_call.1} parent=11 // pred_region
          _
        $region20: #{tpu_custom_call.1} parent=11 // pred_fallthru
          _
        // Predicated region
        $region21: #{tpu_custom_call.1} parent=11 // pred_check
          %p361 = pneg %p199
        $region22: #{tpu_custom_call.1} parent=11 // pred_check_branch
          %363 = sbr.rel (%p361) target = $region24
        $region23: #{tpu_custom_call.1} parent=11 // pred_region
          %s365 = ssub.s32 2048, 2048
          %366 = vsyncadd [#allocation12], %s365
          %s367 = sshll.u32 [#allocation11], 4
          %s368 = int_to_ptr.vmem [resolvable:$true] %s367
          %373 = dma.hbm_to_vmem [thread:$0]  %s6, 2048, %s368, [#allocation12], 128, 128, 8
        $region24: #{tpu_custom_call.1} parent=11 // pred_fallthru
          _
        // Predicated region
        $region25: #{tpu_custom_call.1} parent=11 // pred_check
          %p374 = pneg %p220
        $region26: #{tpu_custom_call.1} parent=11 // pred_check_branch
          %376 = sbr.rel (%p374) target = $region28
        $region27: #{tpu_custom_call.1} parent=11 // pred_region
          _
        $region28: #{tpu_custom_call.1} parent=11 // pred_fallthru
          _
        // Predicated region
        $region29: #{tpu_custom_call.1} parent=11 // pred_check
          %p377 = pneg %p241
        $region30: #{tpu_custom_call.1} parent=11 // pred_check_branch
          %379 = sbr.rel (%p377) target = $region32
        $region31: #{tpu_custom_call.1} parent=11 // pred_region
          %s381 = ssub.s32 2048, 2048
          %382 = vsyncadd [#allocation12], %s381
          %s383 = sshll.u32 [#allocation13], 4
          %s384 = int_to_ptr.vmem [resolvable:$true] %s383
          %389 = dma.hbm_to_vmem [thread:$0]  %s8, 2048, %s384, [#allocation12], 128, 128, 8
        $region32: #{tpu_custom_call.1} parent=11 // pred_fallthru
          _
        // Predicated region
        $region33: #{tpu_custom_call.1} parent=11 // pred_check
          %p390 = pneg %p262
        $region34: #{tpu_custom_call.1} parent=11 // pred_check_branch
          %392 = sbr.rel (%p390) target = $region36
        $region35: #{tpu_custom_call.1} parent=11 // pred_region
          _
        $region36: #{tpu_custom_call.1} parent=11 // pred_fallthru
          _
        // Predicated region
        $region37: #{tpu_custom_call.1} parent=11 // pred_check
          %p393 = pneg %p283
        $region38: #{tpu_custom_call.1} parent=11 // pred_check_branch
          %395 = sbr.rel (%p393) target = $region40
        $region39: #{tpu_custom_call.1} parent=11 // pred_region
          %s397 = ssub.s32 2048, 2048
          %398 = vsyncadd [#allocation15], %s397
          %s399 = sshll.u32 [#allocation14], 4
          %s400 = int_to_ptr.vmem [resolvable:$true] %s399
          %405 = dma.hbm_to_vmem [thread:$0]  %s10, 2048, %s400, [#allocation15], 128, 128, 8
        $region40: #{tpu_custom_call.1} parent=11 // pred_fallthru
          _
        // Predicated region
        $region41: #{tpu_custom_call.1} parent=11 // pred_check
          %p406 = pneg %p304
        $region42: #{tpu_custom_call.1} parent=11 // pred_check_branch
          %408 = sbr.rel (%p406) target = $region44
        $region43: #{tpu_custom_call.1} parent=11 // pred_region
          _
        $region44: #{tpu_custom_call.1} parent=11 // pred_fallthru
          _
      $region12: #{tpu_custom_call.1} parent=5 // pred_fallthru
        _
      %p409 = scmp.lt.s32.totalorder %s32, 2
      // Predicated region
      $region45: #{tpu_custom_call.1} parent=5 // pred_check
        %p410 = pneg %p409
      $region46: #{tpu_custom_call.1} parent=5 // pred_check_branch
        %412 = sbr.rel (%p410) target = $region48
      $region47: #{tpu_custom_call.1} parent=5 // pred_region
        // Predicated region
        $region49: #{tpu_custom_call.1} parent=47 // pred_check
          %p413 = pneg %p52
        $region50: #{tpu_custom_call.1} parent=47 // pred_check_branch
          %415 = sbr.rel (%p413) target = $region52
        $region51: #{tpu_custom_call.1} parent=47 // pred_region
          %s416 = sand.u32 %s42, 1
          %s417 = scalar_lea.sflag [#allocation3], %s416
          %s418 = sand.u32 %s42, 1
          %s419 = smul.addr %s418, 8
          %s420 = scalar_lea.vmem [#allocation2], %s419
          %s422 = ssub.s32 128, 128
          %423 = vsyncadd %s417, %s422
          %s424 = smul.addr %s32, 128
          %s425 = scalar_lea.hbm %s0, %s424
          %s427 = sshll.u32 %s420, 4
          %s428 = int_to_ptr.vmem [resolvable:$true] %s427
          %430 = dma.hbm_to_vmem [thread:$0]  %s425, 128, %s428, %s417
        $region52: #{tpu_custom_call.1} parent=47 // pred_fallthru
          _
        // Predicated region
        $region53: #{tpu_custom_call.1} parent=47 // pred_check
          %p431 = pneg %p78
        $region54: #{tpu_custom_call.1} parent=47 // pred_check_branch
          %433 = sbr.rel (%p431) target = $region56
        $region55: #{tpu_custom_call.1} parent=47 // pred_region
          %s434 = sand.u32 %s32, 1
          %s435 = scalar_lea.sflag [#allocation6], %s434
          %s436 = sand.u32 %s68, 1
          %s437 = smul.addr %s436, 8
          %s438 = scalar_lea.vmem [#allocation5], %s437
          %s440 = ssub.s32 128, 128
          %441 = vsyncadd %s435, %s440
          %s442 = smul.addr %s32, 128
          %s443 = scalar_lea.hbm %s1, %s442
          %s445 = sshll.u32 %s438, 4
          %s446 = int_to_ptr.vmem [resolvable:$true] %s445
          %448 = dma.hbm_to_vmem [thread:$0]  %s443, 128, %s446, %s435
        $region56: #{tpu_custom_call.1} parent=47 // pred_fallthru
          _
        // Predicated region
        $region57: #{tpu_custom_call.1} parent=47 // pred_check
          %p449 = pneg %p104
        $region58: #{tpu_custom_call.1} parent=47 // pred_check_branch
          %451 = sbr.rel (%p449) target = $region60
        $region59: #{tpu_custom_call.1} parent=47 // pred_region
          %s452 = sand.u32 %s32, 1
          %s453 = scalar_lea.sflag [#allocation6], %s452
          %s454 = sand.u32 %s94, 1
          %s455 = smul.addr %s454, 8
          %s456 = scalar_lea.vmem [#allocation7], %s455
          %s458 = ssub.s32 128, 128
          %459 = vsyncadd %s453, %s458
          %s460 = smul.addr %s32, 128
          %s461 = scalar_lea.hbm %s2, %s460
          %s463 = sshll.u32 %s456, 4
          %s464 = int_to_ptr.vmem [resolvable:$true] %s463
          %466 = dma.hbm_to_vmem [thread:$0]  %s461, 128, %s464, %s453
        $region60: #{tpu_custom_call.1} parent=47 // pred_fallthru
          _
        // Predicated region
        $region61: #{tpu_custom_call.1} parent=47 // pred_check
          %p467 = pneg %p130
        $region62: #{tpu_custom_call.1} parent=47 // pred_check_branch
          %469 = sbr.rel (%p467) target = $region64
        $region63: #{tpu_custom_call.1} parent=47 // pred_region
          %s470 = sand.u32 %s32, 1
          %s471 = scalar_lea.sflag [#allocation9], %s470
          %s472 = sand.u32 %s120, 1
          %s473 = smul.addr %s472, 8
          %s474 = scalar_lea.vmem [#allocation8], %s473
          %s476 = ssub.s32 128, 128
          %477 = vsyncadd %s471, %s476
          %s478 = smul.addr %s32, 128
          %s479 = scalar_lea.hbm %s3, %s478
          %s481 = sshll.u32 %s474, 4
          %s482 = int_to_ptr.vmem [resolvable:$true] %s481
          %484 = dma.hbm_to_vmem [thread:$0]  %s479, 128, %s482, %s471
        $region64: #{tpu_custom_call.1} parent=47 // pred_fallthru
          _
      $region48: #{tpu_custom_call.1} parent=5 // pred_fallthru
        _
      %p485 = scmp.le.s32.totalorder 1, %s32
      %p486 = scmp.lt.s32.totalorder %s32, 3
      %p487 = pnand %p485, %p486
      %p488 = pneg %p487
      // Predicated region
      $region65: #{tpu_custom_call.1} parent=5 // pred_check
        _
      $region66: #{tpu_custom_call.1} parent=5 // pred_check_branch
        %490 = sbr.rel (%p487) target = $region68
      $region67: #{tpu_custom_call.1} parent=5 // pred_region
        %s491 = ssub.s32 %s32, 1
        %s492 = sand.u32 %s45, 1
        %s493 = scalar_lea.sflag [#allocation3], %s492
        %s494 = sand.u32 %s45, 1
        %s495 = smul.addr %s494, 8
        %s496 = scalar_lea.vmem [#allocation2], %s495
        // Predicated region
        $region69: #{tpu_custom_call.1} parent=67 // pred_check
          %p497 = pneg %p58
        $region70: #{tpu_custom_call.1} parent=67 // pred_check_branch
          %499 = sbr.rel (%p497) target = $region72
        $region71: #{tpu_custom_call.1} parent=67 // pred_region
          %500 = dma.done %s493, 128
        $region72: #{tpu_custom_call.1} parent=67 // pred_fallthru
          _
        %s501 = sand.u32 %s37, 1
        %s502 = scalar_lea.sflag [#allocation6], %s501
        %s503 = sand.u32 %s71, 1
        %s504 = smul.addr %s503, 8
        %s505 = scalar_lea.vmem [#allocation5], %s504
        // Predicated region
        $region73: #{tpu_custom_call.1} parent=67 // pred_check
          %p506 = pneg %p84
        $region74: #{tpu_custom_call.1} parent=67 // pred_check_branch
          %508 = sbr.rel (%p506) target = $region76
        $region75: #{tpu_custom_call.1} parent=67 // pred_region
          %509 = dma.done %s502, 128
        $region76: #{tpu_custom_call.1} parent=67 // pred_fallthru
          _
        %s510 = sand.u32 %s37, 1
        %s511 = scalar_lea.sflag [#allocation6], %s510
        %s512 = sand.u32 %s97, 1
        %s513 = smul.addr %s512, 8
        %s514 = scalar_lea.vmem [#allocation7], %s513
        // Predicated region
        $region77: #{tpu_custom_call.1} parent=67 // pred_check
          %p515 = pneg %p110
        $region78: #{tpu_custom_call.1} parent=67 // pred_check_branch
          %517 = sbr.rel (%p515) target = $region80
        $region79: #{tpu_custom_call.1} parent=67 // pred_region
          %518 = dma.done %s511, 128
        $region80: #{tpu_custom_call.1} parent=67 // pred_fallthru
          _
        %s519 = sand.u32 %s37, 1
        %s520 = scalar_lea.sflag [#allocation9], %s519
        %s521 = sand.u32 %s123, 1
        %s522 = smul.addr %s521, 8
        %s523 = scalar_lea.vmem [#allocation8], %s522
        // Predicated region
        $region81: #{tpu_custom_call.1} parent=67 // pred_check
          %p524 = pneg %p136
        $region82: #{tpu_custom_call.1} parent=67 // pred_check_branch
          %526 = sbr.rel (%p524) target = $region84
        $region83: #{tpu_custom_call.1} parent=67 // pred_region
          %527 = dma.done %s520, 128
        $region84: #{tpu_custom_call.1} parent=67 // pred_fallthru
          _
        // Predicated region
        $region85: #{tpu_custom_call.1} parent=67 // pred_check
          %p528 = pneg %p157
        $region86: #{tpu_custom_call.1} parent=67 // pred_check_branch
          %530 = sbr.rel (%p528) target = $region88
        $region87: #{tpu_custom_call.1} parent=67 // pred_region
          %531 = dma.done [#allocation9], 2048
        $region88: #{tpu_custom_call.1} parent=67 // pred_fallthru
          _
        // Predicated region
        $region89: #{tpu_custom_call.1} parent=67 // pred_check
          %p532 = pneg %p199
        $region90: #{tpu_custom_call.1} parent=67 // pred_check_branch
          %534 = sbr.rel (%p532) target = $region92
        $region91: #{tpu_custom_call.1} parent=67 // pred_region
          %535 = dma.done [#allocation12], 2048
        $region92: #{tpu_custom_call.1} parent=67 // pred_fallthru
          _
        // Predicated region
        $region93: #{tpu_custom_call.1} parent=67 // pred_check
          %p536 = pneg %p241
        $region94: #{tpu_custom_call.1} parent=67 // pred_check_branch
          %538 = sbr.rel (%p536) target = $region96
        $region95: #{tpu_custom_call.1} parent=67 // pred_region
          %539 = dma.done [#allocation12], 2048
        $region96: #{tpu_custom_call.1} parent=67 // pred_fallthru
          _
        // Predicated region
        $region97: #{tpu_custom_call.1} parent=67 // pred_check
          %p540 = pneg %p283
        $region98: #{tpu_custom_call.1} parent=67 // pred_check_branch
          %542 = sbr.rel (%p540) target = $region100
        $region99: #{tpu_custom_call.1} parent=67 // pred_region
          %543 = dma.done [#allocation15], 2048
        $region100: #{tpu_custom_call.1} parent=67 // pred_fallthru
          _
        %s544 = sand.u32 %s45, 1
        %s545 = scalar_lea.sflag [#allocation3], %s544
        %s546 = sand.u32 %s45, 1
        %s547 = smul.addr %s546, 8
        %s548 = scalar_lea.vmem [#allocation2], %s547
        %p549 = pneg %p58
        %p550 = pneg %p55
        %s551 = sand.u32 %s37, 1
        %s552 = scalar_lea.sflag [#allocation6], %s551
        %s553 = sand.u32 %s71, 1
        %s554 = smul.addr %s553, 8
        %s555 = scalar_lea.vmem [#allocation5], %s554
        %p556 = pneg %p84
        %p557 = pneg %p81
        %s558 = sand.u32 %s37, 1
        %s559 = scalar_lea.sflag [#allocation6], %s558
        %s560 = sand.u32 %s97, 1
        %s561 = smul.addr %s560, 8
        %s562 = scalar_lea.vmem [#allocation7], %s561
        %p563 = pneg %p110
        %p564 = pneg %p107
        %s565 = sand.u32 %s37, 1
        %s566 = scalar_lea.sflag [#allocation9], %s565
        %s567 = sand.u32 %s123, 1
        %s568 = smul.addr %s567, 8
        %s569 = scalar_lea.vmem [#allocation8], %s568
        %p570 = pneg %p136
        %p571 = pneg %p133
        %p572 = pneg %p157
        %p573 = pneg %p154
        %p574 = pneg %p178
        %p575 = pneg %p175
        %p576 = pneg %p199
        %p577 = pneg %p196
        %p578 = pneg %p220
        %p579 = pneg %p217
        %p580 = pneg %p241
        %p581 = pneg %p238
        %p582 = pneg %p262
        %p583 = pneg %p259
        %p584 = pneg %p283
        %p585 = pneg %p280
        %p586 = pneg %p304
        %p587 = pneg %p301
        %p588 = pneg %p330
        %p589 = pneg %p327
        %s590 = sand.u32 %s317, 1
        %s591 = scalar_lea.sflag [#allocation4], %s590
        %s592 = sand.u32 %s317, 1
        %s593 = smul.addr %s592, 8
        %s594 = scalar_lea.vmem [#allocation16], %s593
        %v595 = vld [vmem:[%s496] sm:$0xff]
        %v596 = vld [vmem:[%s505] sm:$0xff]
        %v597 = vld [vmem:[%s514] sm:$0xff]
        %v598 = vld [vmem:[%s523] sm:$0xff]
        %v599 = vld [vmem:[#allocation10] sm:$0xff]
        %v600 = vld [vmem:[#allocation10 + $0x8] sm:$0xff]
        %v601 = vld [vmem:[#allocation10 + $0x10] sm:$0xff]
        %v602 = vld [vmem:[#allocation10 + $0x18] sm:$0xff]
        %v603 = vld [vmem:[#allocation10 + $0x20] sm:$0xff]
        %v604 = vld [vmem:[#allocation10 + $0x28] sm:$0xff]
        %v605 = vld [vmem:[#allocation10 + $0x30] sm:$0xff]
        %v606 = vld [vmem:[#allocation10 + $0x38] sm:$0xff]
        %v607 = vld [vmem:[#allocation10 + $0x40] sm:$0xff]
        %v608 = vld [vmem:[#allocation10 + $0x48] sm:$0xff]
        %v609 = vld [vmem:[#allocation10 + $0x50] sm:$0xff]
        %v610 = vld [vmem:[#allocation10 + $0x58] sm:$0xff]
        %v611 = vld [vmem:[#allocation10 + $0x60] sm:$0xff]
        %v612 = vld [vmem:[#allocation10 + $0x68] sm:$0xff]
        %v613 = vld [vmem:[#allocation10 + $0x70] sm:$0xff]
        %v614 = vld [vmem:[#allocation10 + $0x78] sm:$0xff]
        %v615 = vld [vmem:[%s5] sm:$0x1]
        %v617 = vlaneseq
        %v618 = vshrl.u32 %v617, 7
        %v619 = vsub.s32 0, %v618
        %v620 = vrot.slane %v615, %v619
        %622 = vmatprep.subr.mxu0 0.0
        %623 = vmatpush1.msra.mxu0 %v599
        %624 = vmatprep.subr.mxu0 0.0
        %625 = vmatpush1.msra.mxu0 %v600
        %626 = vmatprep.subr.mxu0 0.0
        %627 = vmatpush1.msra.mxu0 %v601
        %628 = vmatprep.subr.mxu0 0.0
        %629 = vmatpush1.msra.mxu0 %v602
        %630 = vmatprep.subr.mxu0 0.0
        %631 = vmatpush1.msra.mxu0 %v603
        %632 = vmatprep.subr.mxu0 0.0
        %633 = vmatpush1.msra.mxu0 %v604
        %634 = vmatprep.subr.mxu0 0.0
        %635 = vmatpush1.msra.mxu0 %v605
        %636 = vmatprep.subr.mxu0 0.0
        %637 = vmatpush1.msra.mxu0 %v606
        %638 = vmatprep.subr.mxu0 0.0
        %639 = vmatpush1.msra.mxu0 %v607
        %640 = vmatprep.subr.mxu0 0.0
        %641 = vmatpush1.msra.mxu0 %v608
        %642 = vmatprep.subr.mxu0 0.0
        %643 = vmatpush1.msra.mxu0 %v609
        %644 = vmatprep.subr.mxu0 0.0
        %645 = vmatpush1.msra.mxu0 %v610
        %646 = vmatprep.subr.mxu0 0.0
        %647 = vmatpush1.msra.mxu0 %v611
        %648 = vmatprep.subr.mxu0 0.0
        %649 = vmatpush1.msra.mxu0 %v612
        %650 = vmatprep.subr.mxu0 0.0
        %651 = vmatpush1.msra.mxu0 %v613
        %652 = vmatprep.subr.mxu0 0.0
        %653 = vmatpush1.msra.mxu0 %v614
        %654 = vmatprep.subr.mxu0 0.0
        %655 = vmatpush1.msra.mxu0 0.0
        %656 = vmatprep.subr.mxu0 0.0
        %657 = vmatpush1.msra.mxu0 0.0
        %658 = vmatprep.subr.mxu0 0.0
        %659 = vmatpush1.msra.mxu0 0.0
        %660 = vmatprep.subr.mxu0 0.0
        %661 = vmatpush1.msra.mxu0 0.0
        %662 = vmatprep.subr.mxu0 0.0
        %663 = vmatpush1.msra.mxu0 0.0
        %664 = vmatprep.subr.mxu0 0.0
        %665 = vmatpush1.msra.mxu0 0.0
        %666 = vmatprep.subr.mxu0 0.0
        %667 = vmatpush1.msra.mxu0 0.0
        %668 = vmatprep.subr.mxu0 0.0
        %669 = vmatpush1.msra.mxu0 0.0
        %670 = vmatprep.subr.mxu0 0.0
        %671 = vmatpush1.msra.mxu0 0.0
        %672 = vmatprep.subr.mxu0 0.0
        %673 = vmatpush1.msra.mxu0 0.0
        %674 = vmatprep.subr.mxu0 0.0
        %675 = vmatpush1.msra.mxu0 0.0
        %676 = vmatprep.subr.mxu0 0.0
        %677 = vmatpush1.msra.mxu0 0.0
        %678 = vmatprep.subr.mxu0 0.0
        %679 = vmatpush1.msra.mxu0 0.0
        %680 = vmatprep.subr.mxu0 0.0
        %681 = vmatpush1.msra.mxu0 0.0
        %682 = vmatprep.subr.mxu0 0.0
        %683 = vmatpush1.msra.mxu0 0.0
        %684 = vmatprep.subr.mxu0 0.0
        %685 = vmatpush1.msra.mxu0 0.0
        %686 = vmatprep.mubr.f32.mxu0 0.0
        %687 = vmatmul.mubr.f32.gmra.mrb[0].mxu0 %v595
        %v688 = vpop.f32.mrb[0].mxu0
        %v689 = vadd.f32 %v620, %v688
        %v690 = vpop.f32.mrb[0].mxu0
        %691 = vdwg.mxu0
        %v692 = vld [vmem:[#allocation11] sm:$0xff]
        %v693 = vld [vmem:[#allocation11 + $0x8] sm:$0xff]
        %v694 = vld [vmem:[#allocation11 + $0x10] sm:$0xff]
        %v695 = vld [vmem:[#allocation11 + $0x18] sm:$0xff]
        %v696 = vld [vmem:[#allocation11 + $0x20] sm:$0xff]
        %v697 = vld [vmem:[#allocation11 + $0x28] sm:$0xff]
        %v698 = vld [vmem:[#allocation11 + $0x30] sm:$0xff]
        %v699 = vld [vmem:[#allocation11 + $0x38] sm:$0xff]
        %v700 = vld [vmem:[#allocation11 + $0x40] sm:$0xff]
        %v701 = vld [vmem:[#allocation11 + $0x48] sm:$0xff]
        %v702 = vld [vmem:[#allocation11 + $0x50] sm:$0xff]
        %v703 = vld [vmem:[#allocation11 + $0x58] sm:$0xff]
        %v704 = vld [vmem:[#allocation11 + $0x60] sm:$0xff]
        %v705 = vld [vmem:[#allocation11 + $0x68] sm:$0xff]
        %v706 = vld [vmem:[#allocation11 + $0x70] sm:$0xff]
        %v707 = vld [vmem:[#allocation11 + $0x78] sm:$0xff]
        %v708 = vld [vmem:[%s7] sm:$0x1]
        %v710 = vlaneseq
        %v711 = vshrl.u32 %v710, 7
        %v712 = vsub.s32 0, %v711
        %v713 = vrot.slane %v708, %v712
        %715 = vmatprep.subr.mxu0 0.0
        %716 = vmatpush1.msra.mxu0 %v692
        %717 = vmatprep.subr.mxu0 0.0
        %718 = vmatpush1.msra.mxu0 %v693
        %719 = vmatprep.subr.mxu0 0.0
        %720 = vmatpush1.msra.mxu0 %v694
        %721 = vmatprep.subr.mxu0 0.0
        %722 = vmatpush1.msra.mxu0 %v695
        %723 = vmatprep.subr.mxu0 0.0
        %724 = vmatpush1.msra.mxu0 %v696
        %725 = vmatprep.subr.mxu0 0.0
        %726 = vmatpush1.msra.mxu0 %v697
        %727 = vmatprep.subr.mxu0 0.0
        %728 = vmatpush1.msra.mxu0 %v698
        %729 = vmatprep.subr.mxu0 0.0
        %730 = vmatpush1.msra.mxu0 %v699
        %731 = vmatprep.subr.mxu0 0.0
        %732 = vmatpush1.msra.mxu0 %v700
        %733 = vmatprep.subr.mxu0 0.0
        %734 = vmatpush1.msra.mxu0 %v701
        %735 = vmatprep.subr.mxu0 0.0
        %736 = vmatpush1.msra.mxu0 %v702
        %737 = vmatprep.subr.mxu0 0.0
        %738 = vmatpush1.msra.mxu0 %v703
        %739 = vmatprep.subr.mxu0 0.0
        %740 = vmatpush1.msra.mxu0 %v704
        %741 = vmatprep.subr.mxu0 0.0
        %742 = vmatpush1.msra.mxu0 %v705
        %743 = vmatprep.subr.mxu0 0.0
        %744 = vmatpush1.msra.mxu0 %v706
        %745 = vmatprep.subr.mxu0 0.0
        %746 = vmatpush1.msra.mxu0 %v707
        %747 = vmatprep.subr.mxu0 0.0
        %748 = vmatpush1.msra.mxu0 0.0
        %749 = vmatprep.subr.mxu0 0.0
        %750 = vmatpush1.msra.mxu0 0.0
        %751 = vmatprep.subr.mxu0 0.0
        %752 = vmatpush1.msra.mxu0 0.0
        %753 = vmatprep.subr.mxu0 0.0
        %754 = vmatpush1.msra.mxu0 0.0
        %755 = vmatprep.subr.mxu0 0.0
        %756 = vmatpush1.msra.mxu0 0.0
        %757 = vmatprep.subr.mxu0 0.0
        %758 = vmatpush1.msra.mxu0 0.0
        %759 = vmatprep.subr.mxu0 0.0
        %760 = vmatpush1.msra.mxu0 0.0
        %761 = vmatprep.subr.mxu0 0.0
        %762 = vmatpush1.msra.mxu0 0.0
        %763 = vmatprep.subr.mxu0 0.0
        %764 = vmatpush1.msra.mxu0 0.0
        %765 = vmatprep.subr.mxu0 0.0
        %766 = vmatpush1.msra.mxu0 0.0
        %767 = vmatprep.subr.mxu0 0.0
        %768 = vmatpush1.msra.mxu0 0.0
        %769 = vmatprep.subr.mxu0 0.0
        %770 = vmatpush1.msra.mxu0 0.0
        %771 = vmatprep.subr.mxu0 0.0
        %772 = vmatpush1.msra.mxu0 0.0
        %773 = vmatprep.subr.mxu0 0.0
        %774 = vmatpush1.msra.mxu0 0.0
        %775 = vmatprep.subr.mxu0 0.0
        %776 = vmatpush1.msra.mxu0 0.0
        %777 = vmatprep.subr.mxu0 0.0
        %778 = vmatpush1.msra.mxu0 0.0
        %779 = vmatprep.mubr.f32.mxu0 0.0
        %780 = vmatmul.mubr.f32.gmra.mrb[0].mxu0 %v596
        %v781 = vpop.f32.mrb[0].mxu0
        %v782 = vadd.f32 %v713, %v781
        %v783 = vpop.f32.mrb[0].mxu0
        %784 = vdwg.mxu0
        %v785 = vld [vmem:[#allocation13] sm:$0xff]
        %v786 = vld [vmem:[#allocation13 + $0x8] sm:$0xff]
        %v787 = vld [vmem:[#allocation13 + $0x10] sm:$0xff]
        %v788 = vld [vmem:[#allocation13 + $0x18] sm:$0xff]
        %v789 = vld [vmem:[#allocation13 + $0x20] sm:$0xff]
        %v790 = vld [vmem:[#allocation13 + $0x28] sm:$0xff]
        %v791 = vld [vmem:[#allocation13 + $0x30] sm:$0xff]
        %v792 = vld [vmem:[#allocation13 + $0x38] sm:$0xff]
        %v793 = vld [vmem:[#allocation13 + $0x40] sm:$0xff]
        %v794 = vld [vmem:[#allocation13 + $0x48] sm:$0xff]
        %v795 = vld [vmem:[#allocation13 + $0x50] sm:$0xff]
        %v796 = vld [vmem:[#allocation13 + $0x58] sm:$0xff]
        %v797 = vld [vmem:[#allocation13 + $0x60] sm:$0xff]
        %v798 = vld [vmem:[#allocation13 + $0x68] sm:$0xff]
        %v799 = vld [vmem:[#allocation13 + $0x70] sm:$0xff]
        %v800 = vld [vmem:[#allocation13 + $0x78] sm:$0xff]
        %v801 = vld [vmem:[%s9] sm:$0x1]
        %v803 = vlaneseq
        %v804 = vshrl.u32 %v803, 7
        %v805 = vsub.s32 0, %v804
        %v806 = vrot.slane %v801, %v805
        %808 = vmatprep.subr.mxu0 0.0
        %809 = vmatpush1.msra.mxu0 %v785
        %810 = vmatprep.subr.mxu0 0.0
        %811 = vmatpush1.msra.mxu0 %v786
        %812 = vmatprep.subr.mxu0 0.0
        %813 = vmatpush1.msra.mxu0 %v787
        %814 = vmatprep.subr.mxu0 0.0
        %815 = vmatpush1.msra.mxu0 %v788
        %816 = vmatprep.subr.mxu0 0.0
        %817 = vmatpush1.msra.mxu0 %v789
        %818 = vmatprep.subr.mxu0 0.0
        %819 = vmatpush1.msra.mxu0 %v790
        %820 = vmatprep.subr.mxu0 0.0
        %821 = vmatpush1.msra.mxu0 %v791
        %822 = vmatprep.subr.mxu0 0.0
        %823 = vmatpush1.msra.mxu0 %v792
        %824 = vmatprep.subr.mxu0 0.0
        %825 = vmatpush1.msra.mxu0 %v793
        %826 = vmatprep.subr.mxu0 0.0
        %827 = vmatpush1.msra.mxu0 %v794
        %828 = vmatprep.subr.mxu0 0.0
        %829 = vmatpush1.msra.mxu0 %v795
        %830 = vmatprep.subr.mxu0 0.0
        %831 = vmatpush1.msra.mxu0 %v796
        %832 = vmatprep.subr.mxu0 0.0
        %833 = vmatpush1.msra.mxu0 %v797
        %834 = vmatprep.subr.mxu0 0.0
        %835 = vmatpush1.msra.mxu0 %v798
        %836 = vmatprep.subr.mxu0 0.0
        %837 = vmatpush1.msra.mxu0 %v799
        %838 = vmatprep.subr.mxu0 0.0
        %839 = vmatpush1.msra.mxu0 %v800
        %840 = vmatprep.subr.mxu0 0.0
        %841 = vmatpush1.msra.mxu0 0.0
        %842 = vmatprep.subr.mxu0 0.0
        %843 = vmatpush1.msra.mxu0 0.0
        %844 = vmatprep.subr.mxu0 0.0
        %845 = vmatpush1.msra.mxu0 0.0
        %846 = vmatprep.subr.mxu0 0.0
        %847 = vmatpush1.msra.mxu0 0.0
        %848 = vmatprep.subr.mxu0 0.0
        %849 = vmatpush1.msra.mxu0 0.0
        %850 = vmatprep.subr.mxu0 0.0
        %851 = vmatpush1.msra.mxu0 0.0
        %852 = vmatprep.subr.mxu0 0.0
        %853 = vmatpush1.msra.mxu0 0.0
        %854 = vmatprep.subr.mxu0 0.0
        %855 = vmatpush1.msra.mxu0 0.0
        %856 = vmatprep.subr.mxu0 0.0
        %857 = vmatpush1.msra.mxu0 0.0
        %858 = vmatprep.subr.mxu0 0.0
        %859 = vmatpush1.msra.mxu0 0.0
        %860 = vmatprep.subr.mxu0 0.0
        %861 = vmatpush1.msra.mxu0 0.0
        %862 = vmatprep.subr.mxu0 0.0
        %863 = vmatpush1.msra.mxu0 0.0
        %864 = vmatprep.subr.mxu0 0.0
        %865 = vmatpush1.msra.mxu0 0.0
        %866 = vmatprep.subr.mxu0 0.0
        %867 = vmatpush1.msra.mxu0 0.0
        %868 = vmatprep.subr.mxu0 0.0
        %869 = vmatpush1.msra.mxu0 0.0
        %870 = vmatprep.subr.mxu0 0.0
        %871 = vmatpush1.msra.mxu0 0.0
        %872 = vmatprep.mubr.f32.mxu0 0.0
        %873 = vmatmul.mubr.f32.gmra.mrb[0].mxu0 %v597
        %v874 = vpop.f32.mrb[0].mxu0
        %v875 = vadd.f32 %v806, %v874
        %v876 = vpop.f32.mrb[0].mxu0
        %877 = vdwg.mxu0
        %vm878 = vcmask 261120
        %v880 = vsel %vm878, %v689, 0
        %v883 = vsel %vm878, %v782, 0
        %885 = vmatprep.subr.mxu0 0.0
        %886 = vmatpush1.xpose.msra.mxu0 %v883
        %887 = vmatprep.subr.mxu0 0.0
        %888 = vmatpush1.xpose.msra.mxu0 0.0
        %889 = vmatprep.subr.mxu0 0.0
        %890 = vmatpush1.xpose.msra.mxu0 0.0
        %891 = vmatprep.subr.mxu0 0.0
        %892 = vmatpush1.xpose.msra.mxu0 0.0
        %893 = vmatprep.subr.mxu0 0.0
        %894 = vmatpush1.xpose.msra.mxu0 0.0
        %895 = vmatprep.subr.mxu0 0.0
        %896 = vmatpush1.xpose.msra.mxu0 0.0
        %897 = vmatprep.subr.mxu0 0.0
        %898 = vmatpush1.xpose.msra.mxu0 0.0
        %899 = vmatprep.subr.mxu0 0.0
        %900 = vmatpush1.xpose.msra.mxu0 0.0
        %901 = vmatprep.subr.mxu0 0.0
        %902 = vmatpush1.xpose.msra.mxu0 0.0
        %903 = vmatprep.subr.mxu0 0.0
        %904 = vmatpush1.xpose.msra.mxu0 0.0
        %905 = vmatprep.subr.mxu0 0.0
        %906 = vmatpush1.xpose.msra.mxu0 0.0
        %907 = vmatprep.subr.mxu0 0.0
        %908 = vmatpush1.xpose.msra.mxu0 0.0
        %909 = vmatprep.subr.mxu0 0.0
        %910 = vmatpush1.xpose.msra.mxu0 0.0
        %911 = vmatprep.subr.mxu0 0.0
        %912 = vmatpush1.xpose.msra.mxu0 0.0
        %913 = vmatprep.subr.mxu0 0.0
        %914 = vmatpush1.xpose.msra.mxu0 0.0
        %915 = vmatprep.subr.mxu0 0.0
        %916 = vmatpush1.xpose.msra.mxu0 0.0
        %917 = vmatprep.subr.mxu0 0.0
        %918 = vmatpush1.xpose.msra.mxu0 0.0
        %919 = vmatprep.subr.mxu0 0.0
        %920 = vmatpush1.xpose.msra.mxu0 0.0
        %921 = vmatprep.subr.mxu0 0.0
        %922 = vmatpush1.xpose.msra.mxu0 0.0
        %923 = vmatprep.subr.mxu0 0.0
        %924 = vmatpush1.xpose.msra.mxu0 0.0
        %925 = vmatprep.subr.mxu0 0.0
        %926 = vmatpush1.xpose.msra.mxu0 0.0
        %927 = vmatprep.subr.mxu0 0.0
        %928 = vmatpush1.xpose.msra.mxu0 0.0
        %929 = vmatprep.subr.mxu0 0.0
        %930 = vmatpush1.xpose.msra.mxu0 0.0
        %931 = vmatprep.subr.mxu0 0.0
        %932 = vmatpush1.xpose.msra.mxu0 0.0
        %933 = vmatprep.subr.mxu0 0.0
        %934 = vmatpush1.xpose.msra.mxu0 0.0
        %935 = vmatprep.subr.mxu0 0.0
        %936 = vmatpush1.xpose.msra.mxu0 0.0
        %937 = vmatprep.subr.mxu0 0.0
        %938 = vmatpush1.xpose.msra.mxu0 0.0
        %939 = vmatprep.subr.mxu0 0.0
        %940 = vmatpush1.xpose.msra.mxu0 0.0
        %941 = vmatprep.subr.mxu0 0.0
        %942 = vmatpush1.xpose.msra.mxu0 0.0
        %943 = vmatprep.subr.mxu0 0.0
        %944 = vmatpush1.xpose.msra.mxu0 0.0
        %945 = vmatprep.subr.mxu0 0.0
        %946 = vmatpush1.xpose.msra.mxu0 0.0
        %947 = vmatprep.subr.mxu0 0.0
        %948 = vmatpush1.xpose.msra.mxu0 0.0
        %949 = vmatprep.mubr.f32.mxu0 0.0
        %950 = vmatmul.mubr.f32.gmra.mrb[0].mxu0 %v880
        %v951 = vpop.f32.mrb[0].mxu0
        %v952 = vadd.f32 0.0, %v951
        %v953 = vpop.f32.mrb[0].mxu0
        %954 = vdwg.mxu0
        %v955 = vmul.f32 %v952, 0.17677669
        %vm956 = vcmp.eq.s32.totalorder %v598, 0
        %v957 = vsel %vm956, -1e+09, %v955
        %vm958 = vcmask 64512
        %v959 = vsel %vm958, %v957, -inf
        %960 = vmax.xlane.f32.xlu0 %v959
        %v961 = vpop.xlane.xlu0 %960
        %v962 = vsub.f32 %v957, %v961
        %v963 = vmul.f32 %v962, 1.442695
        %v964 = vpow.pop %v963
        %v965 = vsel %vm958, %v964, 0.0
        %966 = vadd.xlane.f32.xlu0 %v965
        %v967 = vpop.xlane.xlu0 %966
        %v968 = vrcp.pop %v967
        %v969 = vmul.f32 %v964, %v968
        %v971 = vsel %vm958, %v969, 0
        %973 = vmatprep.subr.mxu0 0.0
        %974 = vmatpush1.msra.mxu0 %v875
        %975 = vmatprep.subr.mxu0 0.0
        %976 = vmatpush1.msra.mxu0 0.0
        %977 = vmatprep.subr.mxu0 0.0
        %978 = vmatpush1.msra.mxu0 0.0
        %979 = vmatprep.subr.mxu0 0.0
        %980 = vmatpush1.msra.mxu0 0.0
        %981 = vmatprep.subr.mxu0 0.0
        %982 = vmatpush1.msra.mxu0 0.0
        %983 = vmatprep.subr.mxu0 0.0
        %984 = vmatpush1.msra.mxu0 0.0
        %985 = vmatprep.subr.mxu0 0.0
        %986 = vmatpush1.msra.mxu0 0.0
        %987 = vmatprep.subr.mxu0 0.0
        %988 = vmatpush1.msra.mxu0 0.0
        %989 = vmatprep.subr.mxu0 0.0
        %990 = vmatpush1.msra.mxu0 0.0
        %991 = vmatprep.subr.mxu0 0.0
        %992 = vmatpush1.msra.mxu0 0.0
        %993 = vmatprep.subr.mxu0 0.0
        %994 = vmatpush1.msra.mxu0 0.0
        %995 = vmatprep.subr.mxu0 0.0
        %996 = vmatpush1.msra.mxu0 0.0
        %997 = vmatprep.subr.mxu0 0.0
        %998 = vmatpush1.msra.mxu0 0.0
        %999 = vmatprep.subr.mxu0 0.0
        %1000 = vmatpush1.msra.mxu0 0.0
        %1001 = vmatprep.subr.mxu0 0.0
        %1002 = vmatpush1.msra.mxu0 0.0
        %1003 = vmatprep.subr.mxu0 0.0
        %1004 = vmatpush1.msra.mxu0 0.0
        %1005 = vmatprep.subr.mxu0 0.0
        %1006 = vmatpush1.msra.mxu0 0.0
        %1007 = vmatprep.subr.mxu0 0.0
        %1008 = vmatpush1.msra.mxu0 0.0
        %1009 = vmatprep.subr.mxu0 0.0
        %1010 = vmatpush1.msra.mxu0 0.0
        %1011 = vmatprep.subr.mxu0 0.0
        %1012 = vmatpush1.msra.mxu0 0.0
        %1013 = vmatprep.subr.mxu0 0.0
        %1014 = vmatpush1.msra.mxu0 0.0
        %1015 = vmatprep.subr.mxu0 0.0
        %1016 = vmatpush1.msra.mxu0 0.0
        %1017 = vmatprep.subr.mxu0 0.0
        %1018 = vmatpush1.msra.mxu0 0.0
        %1019 = vmatprep.subr.mxu0 0.0
        %1020 = vmatpush1.msra.mxu0 0.0
        %1021 = vmatprep.subr.mxu0 0.0
        %1022 = vmatpush1.msra.mxu0 0.0
        %1023 = vmatprep.subr.mxu0 0.0
        %1024 = vmatpush1.msra.mxu0 0.0
        %1025 = vmatprep.subr.mxu0 0.0
        %1026 = vmatpush1.msra.mxu0 0.0
        %1027 = vmatprep.subr.mxu0 0.0
        %1028 = vmatpush1.msra.mxu0 0.0
        %1029 = vmatprep.subr.mxu0 0.0
        %1030 = vmatpush1.msra.mxu0 0.0
        %1031 = vmatprep.subr.mxu0 0.0
        %1032 = vmatpush1.msra.mxu0 0.0
        %1033 = vmatprep.subr.mxu0 0.0
        %1034 = vmatpush1.msra.mxu0 0.0
        %1035 = vmatprep.subr.mxu0 0.0
        %1036 = vmatpush1.msra.mxu0 0.0
        %1037 = vmatprep.mubr.f32.mxu0 0.0
        %1038 = vmatmul.mubr.f32.gmra.mrb[0].mxu0 %v971
        %v1039 = vpop.f32.mrb[0].mxu0
        %v1040 = vadd.f32 0.0, %v1039
        %v1041 = vpop.f32.mrb[0].mxu0
        %1042 = vdwg.mxu0
        %1043 = vrot.lane.b32.xlu0 %v689, 96
        %v1044 = vpop.permute.xlu0 %1043
        %1045 = vrot.lane.b32.xlu0 %v782, 96
        %v1046 = vpop.permute.xlu0 %1045
        %v1047 = vsel %vm878, %v1044, 0
        %v1049 = vsel %vm878, %v1046, 0
        %1051 = vmatprep.subr.mxu0 0.0
        %1052 = vmatpush1.xpose.msra.mxu0 %v1049
        %1053 = vmatprep.subr.mxu0 0.0
        %1054 = vmatpush1.xpose.msra.mxu0 0.0
        %1055 = vmatprep.subr.mxu0 0.0
        %1056 = vmatpush1.xpose.msra.mxu0 0.0
        %1057 = vmatprep.subr.mxu0 0.0
        %1058 = vmatpush1.xpose.msra.mxu0 0.0
        %1059 = vmatprep.subr.mxu0 0.0
        %1060 = vmatpush1.xpose.msra.mxu0 0.0
        %1061 = vmatprep.subr.mxu0 0.0
        %1062 = vmatpush1.xpose.msra.mxu0 0.0
        %1063 = vmatprep.subr.mxu0 0.0
        %1064 = vmatpush1.xpose.msra.mxu0 0.0
        %1065 = vmatprep.subr.mxu0 0.0
        %1066 = vmatpush1.xpose.msra.mxu0 0.0
        %1067 = vmatprep.subr.mxu0 0.0
        %1068 = vmatpush1.xpose.msra.mxu0 0.0
        %1069 = vmatprep.subr.mxu0 0.0
        %1070 = vmatpush1.xpose.msra.mxu0 0.0
        %1071 = vmatprep.subr.mxu0 0.0
        %1072 = vmatpush1.xpose.msra.mxu0 0.0
        %1073 = vmatprep.subr.mxu0 0.0
        %1074 = vmatpush1.xpose.msra.mxu0 0.0
        %1075 = vmatprep.subr.mxu0 0.0
        %1076 = vmatpush1.xpose.msra.mxu0 0.0
        %1077 = vmatprep.subr.mxu0 0.0
        %1078 = vmatpush1.xpose.msra.mxu0 0.0
        %1079 = vmatprep.subr.mxu0 0.0
        %1080 = vmatpush1.xpose.msra.mxu0 0.0
        %1081 = vmatprep.subr.mxu0 0.0
        %1082 = vmatpush1.xpose.msra.mxu0 0.0
        %1083 = vmatprep.subr.mxu0 0.0
        %1084 = vmatpush1.xpose.msra.mxu0 0.0
        %1085 = vmatprep.subr.mxu0 0.0
        %1086 = vmatpush1.xpose.msra.mxu0 0.0
        %1087 = vmatprep.subr.mxu0 0.0
        %1088 = vmatpush1.xpose.msra.mxu0 0.0
        %1089 = vmatprep.subr.mxu0 0.0
        %1090 = vmatpush1.xpose.msra.mxu0 0.0
        %1091 = vmatprep.subr.mxu0 0.0
        %1092 = vmatpush1.xpose.msra.mxu0 0.0
        %1093 = vmatprep.subr.mxu0 0.0
        %1094 = vmatpush1.xpose.msra.mxu0 0.0
        %1095 = vmatprep.subr.mxu0 0.0
        %1096 = vmatpush1.xpose.msra.mxu0 0.0
        %1097 = vmatprep.subr.mxu0 0.0
        %1098 = vmatpush1.xpose.msra.mxu0 0.0
        %1099 = vmatprep.subr.mxu0 0.0
        %1100 = vmatpush1.xpose.msra.mxu0 0.0
        %1101 = vmatprep.subr.mxu0 0.0
        %1102 = vmatpush1.xpose.msra.mxu0 0.0
        %1103 = vmatprep.subr.mxu0 0.0
        %1104 = vmatpush1.xpose.msra.mxu0 0.0
        %1105 = vmatprep.subr.mxu0 0.0
        %1106 = vmatpush1.xpose.msra.mxu0 0.0
        %1107 = vmatprep.subr.mxu0 0.0
        %1108 = vmatpush1.xpose.msra.mxu0 0.0
        %1109 = vmatprep.subr.mxu0 0.0
        %1110 = vmatpush1.xpose.msra.mxu0 0.0
        %1111 = vmatprep.subr.mxu0 0.0
        %1112 = vmatpush1.xpose.msra.mxu0 0.0
        %1113 = vmatprep.subr.mxu0 0.0
        %1114 = vmatpush1.xpose.msra.mxu0 0.0
        %1115 = vmatprep.mubr.f32.mxu0 0.0
        %1116 = vmatmul.mubr.f32.gmra.mrb[0].mxu0 %v1047
        %v1117 = vpop.f32.mrb[0].mxu0
        %v1118 = vadd.f32 0.0, %v1117
        %v1119 = vpop.f32.mrb[0].mxu0
        %1120 = vdwg.mxu0
        %v1121 = vmul.f32 %v1118, 0.17677669
        %v1122 = vsel %vm956, -1e+09, %v1121
        %v1123 = vsel %vm958, %v1122, -inf
        %1124 = vmax.xlane.f32.xlu0 %v1123
        %v1125 = vpop.xlane.xlu0 %1124
        %v1126 = vsub.f32 %v1122, %v1125
        %v1127 = vmul.f32 %v1126, 1.442695
        %v1128 = vpow.pop %v1127
        %v1129 = vsel %vm958, %v1128, 0.0
        %1130 = vadd.xlane.f32.xlu0 %v1129
        %v1131 = vpop.xlane.xlu0 %1130
        %v1132 = vrcp.pop %v1131
        %v1133 = vmul.f32 %v1128, %v1132
        %1135 = vrot.lane.b32.xlu0 %v875, 96
        %v1136 = vpop.permute.xlu0 %1135
        %v1139 = vsel %vm958, %v1133, 0
        %1141 = vmatprep.subr.mxu0 0.0
        %1142 = vmatpush1.msra.mxu0 %v1136
        %1143 = vmatprep.subr.mxu0 0.0
        %1144 = vmatpush1.msra.mxu0 0.0
        %1145 = vmatprep.subr.mxu0 0.0
        %1146 = vmatpush1.msra.mxu0 0.0
        %1147 = vmatprep.subr.mxu0 0.0
        %1148 = vmatpush1.msra.mxu0 0.0
        %1149 = vmatprep.subr.mxu0 0.0
        %1150 = vmatpush1.msra.mxu0 0.0
        %1151 = vmatprep.subr.mxu0 0.0
        %1152 = vmatpush1.msra.mxu0 0.0
        %1153 = vmatprep.subr.mxu0 0.0
        %1154 = vmatpush1.msra.mxu0 0.0
        %1155 = vmatprep.subr.mxu0 0.0
        %1156 = vmatpush1.msra.mxu0 0.0
        %1157 = vmatprep.subr.mxu0 0.0
        %1158 = vmatpush1.msra.mxu0 0.0
        %1159 = vmatprep.subr.mxu0 0.0
        %1160 = vmatpush1.msra.mxu0 0.0
        %1161 = vmatprep.subr.mxu0 0.0
        %1162 = vmatpush1.msra.mxu0 0.0
        %1163 = vmatprep.subr.mxu0 0.0
        %1164 = vmatpush1.msra.mxu0 0.0
        %1165 = vmatprep.subr.mxu0 0.0
        %1166 = vmatpush1.msra.mxu0 0.0
        %1167 = vmatprep.subr.mxu0 0.0
        %1168 = vmatpush1.msra.mxu0 0.0
        %1169 = vmatprep.subr.mxu0 0.0
        %1170 = vmatpush1.msra.mxu0 0.0
        %1171 = vmatprep.subr.mxu0 0.0
        %1172 = vmatpush1.msra.mxu0 0.0
        %1173 = vmatprep.subr.mxu0 0.0
        %1174 = vmatpush1.msra.mxu0 0.0
        %1175 = vmatprep.subr.mxu0 0.0
        %1176 = vmatpush1.msra.mxu0 0.0
        %1177 = vmatprep.subr.mxu0 0.0
        %1178 = vmatpush1.msra.mxu0 0.0
        %1179 = vmatprep.subr.mxu0 0.0
        %1180 = vmatpush1.msra.mxu0 0.0
        %1181 = vmatprep.subr.mxu0 0.0
        %1182 = vmatpush1.msra.mxu0 0.0
        %1183 = vmatprep.subr.mxu0 0.0
        %1184 = vmatpush1.msra.mxu0 0.0
        %1185 = vmatprep.subr.mxu0 0.0
        %1186 = vmatpush1.msra.mxu0 0.0
        %1187 = vmatprep.subr.mxu0 0.0
        %1188 = vmatpush1.msra.mxu0 0.0
        %1189 = vmatprep.subr.mxu0 0.0
        %1190 = vmatpush1.msra.mxu0 0.0
        %1191 = vmatprep.subr.mxu0 0.0
        %1192 = vmatpush1.msra.mxu0 0.0
        %1193 = vmatprep.subr.mxu0 0.0
        %1194 = vmatpush1.msra.mxu0 0.0
        %1195 = vmatprep.subr.mxu0 0.0
        %1196 = vmatpush1.msra.mxu0 0.0
        %1197 = vmatprep.subr.mxu0 0.0
        %1198 = vmatpush1.msra.mxu0 0.0
        %1199 = vmatprep.subr.mxu0 0.0
        %1200 = vmatpush1.msra.mxu0 0.0
        %1201 = vmatprep.subr.mxu0 0.0
        %1202 = vmatpush1.msra.mxu0 0.0
        %1203 = vmatprep.subr.mxu0 0.0
        %1204 = vmatpush1.msra.mxu0 0.0
        %1205 = vmatprep.mubr.f32.mxu0 0.0
        %1206 = vmatmul.mubr.f32.gmra.mrb[0].mxu0 %v1139
        %v1207 = vpop.f32.mrb[0].mxu0
        %v1208 = vadd.f32 0.0, %v1207
        %v1209 = vpop.f32.mrb[0].mxu0
        %1210 = vdwg.mxu0
        %1211 = vrot.lane.b32.xlu0 %v689, 64
        %v1212 = vpop.permute.xlu0 %1211
        %1213 = vrot.lane.b32.xlu0 %v782, 64
        %v1214 = vpop.permute.xlu0 %1213
        %v1215 = vsel %vm878, %v1212, 0
        %v1217 = vsel %vm878, %v1214, 0
        %1219 = vmatprep.subr.mxu0 0.0
        %1220 = vmatpush1.xpose.msra.mxu0 %v1217
        %1221 = vmatprep.subr.mxu0 0.0
        %1222 = vmatpush1.xpose.msra.mxu0 0.0
        %1223 = vmatprep.subr.mxu0 0.0
        %1224 = vmatpush1.xpose.msra.mxu0 0.0
        %1225 = vmatprep.subr.mxu0 0.0
        %1226 = vmatpush1.xpose.msra.mxu0 0.0
        %1227 = vmatprep.subr.mxu0 0.0
        %1228 = vmatpush1.xpose.msra.mxu0 0.0
        %1229 = vmatprep.subr.mxu0 0.0
        %1230 = vmatpush1.xpose.msra.mxu0 0.0
        %1231 = vmatprep.subr.mxu0 0.0
        %1232 = vmatpush1.xpose.msra.mxu0 0.0
        %1233 = vmatprep.subr.mxu0 0.0
        %1234 = vmatpush1.xpose.msra.mxu0 0.0
        %1235 = vmatprep.subr.mxu0 0.0
        %1236 = vmatpush1.xpose.msra.mxu0 0.0
        %1237 = vmatprep.subr.mxu0 0.0
        %1238 = vmatpush1.xpose.msra.mxu0 0.0
        %1239 = vmatprep.subr.mxu0 0.0
        %1240 = vmatpush1.xpose.msra.mxu0 0.0
        %1241 = vmatprep.subr.mxu0 0.0
        %1242 = vmatpush1.xpose.msra.mxu0 0.0
        %1243 = vmatprep.subr.mxu0 0.0
        %1244 = vmatpush1.xpose.msra.mxu0 0.0
        %1245 = vmatprep.subr.mxu0 0.0
        %1246 = vmatpush1.xpose.msra.mxu0 0.0
        %1247 = vmatprep.subr.mxu0 0.0
        %1248 = vmatpush1.xpose.msra.mxu0 0.0
        %1249 = vmatprep.subr.mxu0 0.0
        %1250 = vmatpush1.xpose.msra.mxu0 0.0
        %1251 = vmatprep.subr.mxu0 0.0
        %1252 = vmatpush1.xpose.msra.mxu0 0.0
        %1253 = vmatprep.subr.mxu0 0.0
        %1254 = vmatpush1.xpose.msra.mxu0 0.0
        %1255 = vmatprep.subr.mxu0 0.0
        %1256 = vmatpush1.xpose.msra.mxu0 0.0
        %1257 = vmatprep.subr.mxu0 0.0
        %1258 = vmatpush1.xpose.msra.mxu0 0.0
        %1259 = vmatprep.subr.mxu0 0.0
        %1260 = vmatpush1.xpose.msra.mxu0 0.0
        %1261 = vmatprep.subr.mxu0 0.0
        %1262 = vmatpush1.xpose.msra.mxu0 0.0
        %1263 = vmatprep.subr.mxu0 0.0
        %1264 = vmatpush1.xpose.msra.mxu0 0.0
        %1265 = vmatprep.subr.mxu0 0.0
        %1266 = vmatpush1.xpose.msra.mxu0 0.0
        %1267 = vmatprep.subr.mxu0 0.0
        %1268 = vmatpush1.xpose.msra.mxu0 0.0
        %1269 = vmatprep.subr.mxu0 0.0
        %1270 = vmatpush1.xpose.msra.mxu0 0.0
        %1271 = vmatprep.subr.mxu0 0.0
        %1272 = vmatpush1.xpose.msra.mxu0 0.0
        %1273 = vmatprep.subr.mxu0 0.0
        %1274 = vmatpush1.xpose.msra.mxu0 0.0
        %1275 = vmatprep.subr.mxu0 0.0
        %1276 = vmatpush1.xpose.msra.mxu0 0.0
        %1277 = vmatprep.subr.mxu0 0.0
        %1278 = vmatpush1.xpose.msra.mxu0 0.0
        %1279 = vmatprep.subr.mxu0 0.0
        %1280 = vmatpush1.xpose.msra.mxu0 0.0
        %1281 = vmatprep.subr.mxu0 0.0
        %1282 = vmatpush1.xpose.msra.mxu0 0.0
        %1283 = vmatprep.mubr.f32.mxu0 0.0
        %1284 = vmatmul.mubr.f32.gmra.mrb[0].mxu0 %v1215
        %v1285 = vpop.f32.mrb[0].mxu0
        %v1286 = vadd.f32 0.0, %v1285
        %v1287 = vpop.f32.mrb[0].mxu0
        %1288 = vdwg.mxu0
        %v1289 = vmul.f32 %v1286, 0.17677669
        %v1290 = vsel %vm956, -1e+09, %v1289
        %v1291 = vsel %vm958, %v1290, -inf
        %1292 = vmax.xlane.f32.xlu0 %v1291
        %v1293 = vpop.xlane.xlu0 %1292
        %v1294 = vsub.f32 %v1290, %v1293
        %v1295 = vmul.f32 %v1294, 1.442695
        %v1296 = vpow.pop %v1295
        %v1297 = vsel %vm958, %v1296, 0.0
        %1298 = vadd.xlane.f32.xlu0 %v1297
        %v1299 = vpop.xlane.xlu0 %1298
        %v1300 = vrcp.pop %v1299
        %v1301 = vmul.f32 %v1296, %v1300
        %1302 = vrot.lane.b32.xlu0 %v875, 64
        %v1303 = vpop.permute.xlu0 %1302
        %v1306 = vsel %vm958, %v1301, 0
        %1308 = vmatprep.subr.mxu0 0.0
        %1309 = vmatpush1.msra.mxu0 %v1303
        %1310 = vmatprep.subr.mxu0 0.0
        %1311 = vmatpush1.msra.mxu0 0.0
        %1312 = vmatprep.subr.mxu0 0.0
        %1313 = vmatpush1.msra.mxu0 0.0
        %1314 = vmatprep.subr.mxu0 0.0
        %1315 = vmatpush1.msra.mxu0 0.0
        %1316 = vmatprep.subr.mxu0 0.0
        %1317 = vmatpush1.msra.mxu0 0.0
        %1318 = vmatprep.subr.mxu0 0.0
        %1319 = vmatpush1.msra.mxu0 0.0
        %1320 = vmatprep.subr.mxu0 0.0
        %1321 = vmatpush1.msra.mxu0 0.0
        %1322 = vmatprep.subr.mxu0 0.0
        %1323 = vmatpush1.msra.mxu0 0.0
        %1324 = vmatprep.subr.mxu0 0.0
        %1325 = vmatpush1.msra.mxu0 0.0
        %1326 = vmatprep.subr.mxu0 0.0
        %1327 = vmatpush1.msra.mxu0 0.0
        %1328 = vmatprep.subr.mxu0 0.0
        %1329 = vmatpush1.msra.mxu0 0.0
        %1330 = vmatprep.subr.mxu0 0.0
        %1331 = vmatpush1.msra.mxu0 0.0
        %1332 = vmatprep.subr.mxu0 0.0
        %1333 = vmatpush1.msra.mxu0 0.0
        %1334 = vmatprep.subr.mxu0 0.0
        %1335 = vmatpush1.msra.mxu0 0.0
        %1336 = vmatprep.subr.mxu0 0.0
        %1337 = vmatpush1.msra.mxu0 0.0
        %1338 = vmatprep.subr.mxu0 0.0
        %1339 = vmatpush1.msra.mxu0 0.0
        %1340 = vmatprep.subr.mxu0 0.0
        %1341 = vmatpush1.msra.mxu0 0.0
        %1342 = vmatprep.subr.mxu0 0.0
        %1343 = vmatpush1.msra.mxu0 0.0
        %1344 = vmatprep.subr.mxu0 0.0
        %1345 = vmatpush1.msra.mxu0 0.0
        %1346 = vmatprep.subr.mxu0 0.0
        %1347 = vmatpush1.msra.mxu0 0.0
        %1348 = vmatprep.subr.mxu0 0.0
        %1349 = vmatpush1.msra.mxu0 0.0
        %1350 = vmatprep.subr.mxu0 0.0
        %1351 = vmatpush1.msra.mxu0 0.0
        %1352 = vmatprep.subr.mxu0 0.0
        %1353 = vmatpush1.msra.mxu0 0.0
        %1354 = vmatprep.subr.mxu0 0.0
        %1355 = vmatpush1.msra.mxu0 0.0
        %1356 = vmatprep.subr.mxu0 0.0
        %1357 = vmatpush1.msra.mxu0 0.0
        %1358 = vmatprep.subr.mxu0 0.0
        %1359 = vmatpush1.msra.mxu0 0.0
        %1360 = vmatprep.subr.mxu0 0.0
        %1361 = vmatpush1.msra.mxu0 0.0
        %1362 = vmatprep.subr.mxu0 0.0
        %1363 = vmatpush1.msra.mxu0 0.0
        %1364 = vmatprep.subr.mxu0 0.0
        %1365 = vmatpush1.msra.mxu0 0.0
        %1366 = vmatprep.subr.mxu0 0.0
        %1367 = vmatpush1.msra.mxu0 0.0
        %1368 = vmatprep.subr.mxu0 0.0
        %1369 = vmatpush1.msra.mxu0 0.0
        %1370 = vmatprep.subr.mxu0 0.0
        %1371 = vmatpush1.msra.mxu0 0.0
        %1372 = vmatprep.mubr.f32.mxu0 0.0
        %1373 = vmatmul.mubr.f32.gmra.mrb[0].mxu0 %v1306
        %v1374 = vpop.f32.mrb[0].mxu0
        %v1375 = vadd.f32 0.0, %v1374
        %v1376 = vpop.f32.mrb[0].mxu0
        %1377 = vdwg.mxu0
        %1378 = vrot.lane.b32.xlu0 %v689, 32
        %v1379 = vpop.permute.xlu0 %1378
        %1380 = vrot.lane.b32.xlu0 %v782, 32
        %v1381 = vpop.permute.xlu0 %1380
        %v1382 = vsel %vm878, %v1379, 0
        %v1384 = vsel %vm878, %v1381, 0
        %1386 = vmatprep.subr.mxu0 0.0
        %1387 = vmatpush1.xpose.msra.mxu0 %v1384
        %1388 = vmatprep.subr.mxu0 0.0
        %1389 = vmatpush1.xpose.msra.mxu0 0.0
        %1390 = vmatprep.subr.mxu0 0.0
        %1391 = vmatpush1.xpose.msra.mxu0 0.0
        %1392 = vmatprep.subr.mxu0 0.0
        %1393 = vmatpush1.xpose.msra.mxu0 0.0
        %1394 = vmatprep.subr.mxu0 0.0
        %1395 = vmatpush1.xpose.msra.mxu0 0.0
        %1396 = vmatprep.subr.mxu0 0.0
        %1397 = vmatpush1.xpose.msra.mxu0 0.0
        %1398 = vmatprep.subr.mxu0 0.0
        %1399 = vmatpush1.xpose.msra.mxu0 0.0
        %1400 = vmatprep.subr.mxu0 0.0
        %1401 = vmatpush1.xpose.msra.mxu0 0.0
        %1402 = vmatprep.subr.mxu0 0.0
        %1403 = vmatpush1.xpose.msra.mxu0 0.0
        %1404 = vmatprep.subr.mxu0 0.0
        %1405 = vmatpush1.xpose.msra.mxu0 0.0
        %1406 = vmatprep.subr.mxu0 0.0
        %1407 = vmatpush1.xpose.msra.mxu0 0.0
        %1408 = vmatprep.subr.mxu0 0.0
        %1409 = vmatpush1.xpose.msra.mxu0 0.0
        %1410 = vmatprep.subr.mxu0 0.0
        %1411 = vmatpush1.xpose.msra.mxu0 0.0
        %1412 = vmatprep.subr.mxu0 0.0
        %1413 = vmatpush1.xpose.msra.mxu0 0.0
        %1414 = vmatprep.subr.mxu0 0.0
        %1415 = vmatpush1.xpose.msra.mxu0 0.0
        %1416 = vmatprep.subr.mxu0 0.0
        %1417 = vmatpush1.xpose.msra.mxu0 0.0
        %1418 = vmatprep.subr.mxu0 0.0
        %1419 = vmatpush1.xpose.msra.mxu0 0.0
        %1420 = vmatprep.subr.mxu0 0.0
        %1421 = vmatpush1.xpose.msra.mxu0 0.0
        %1422 = vmatprep.subr.mxu0 0.0
        %1423 = vmatpush1.xpose.msra.mxu0 0.0
        %1424 = vmatprep.subr.mxu0 0.0
        %1425 = vmatpush1.xpose.msra.mxu0 0.0
        %1426 = vmatprep.subr.mxu0 0.0
        %1427 = vmatpush1.xpose.msra.mxu0 0.0
        %1428 = vmatprep.subr.mxu0 0.0
        %1429 = vmatpush1.xpose.msra.mxu0 0.0
        %1430 = vmatprep.subr.mxu0 0.0
        %1431 = vmatpush1.xpose.msra.mxu0 0.0
        %1432 = vmatprep.subr.mxu0 0.0
        %1433 = vmatpush1.xpose.msra.mxu0 0.0
        %1434 = vmatprep.subr.mxu0 0.0
        %1435 = vmatpush1.xpose.msra.mxu0 0.0
        %1436 = vmatprep.subr.mxu0 0.0
        %1437 = vmatpush1.xpose.msra.mxu0 0.0
        %1438 = vmatprep.subr.mxu0 0.0
        %1439 = vmatpush1.xpose.msra.mxu0 0.0
        %1440 = vmatprep.subr.mxu0 0.0
        %1441 = vmatpush1.xpose.msra.mxu0 0.0
        %1442 = vmatprep.subr.mxu0 0.0
        %1443 = vmatpush1.xpose.msra.mxu0 0.0
        %1444 = vmatprep.subr.mxu0 0.0
        %1445 = vmatpush1.xpose.msra.mxu0 0.0
        %1446 = vmatprep.subr.mxu0 0.0
        %1447 = vmatpush1.xpose.msra.mxu0 0.0
        %1448 = vmatprep.subr.mxu0 0.0
        %1449 = vmatpush1.xpose.msra.mxu0 0.0
        %1450 = vmatprep.mubr.f32.mxu0 0.0
        %1451 = vmatmul.mubr.f32.gmra.mrb[0].mxu0 %v1382
        %v1452 = vpop.f32.mrb[0].mxu0
        %v1453 = vadd.f32 0.0, %v1452
        %v1454 = vpop.f32.mrb[0].mxu0
        %1455 = vdwg.mxu0
        %v1456 = vmul.f32 %v1453, 0.17677669
        %v1457 = vsel %vm956, -1e+09, %v1456
        %v1458 = vsel %vm958, %v1457, -inf
        %1459 = vmax.xlane.f32.xlu0 %v1458
        %v1460 = vpop.xlane.xlu0 %1459
        %v1461 = vsub.f32 %v1457, %v1460
        %v1462 = vmul.f32 %v1461, 1.442695
        %v1463 = vpow.pop %v1462
        %v1464 = vsel %vm958, %v1463, 0.0
        %1465 = vadd.xlane.f32.xlu0 %v1464
        %v1466 = vpop.xlane.xlu0 %1465
        %v1467 = vrcp.pop %v1466
        %v1468 = vmul.f32 %v1463, %v1467
        %1469 = vrot.lane.b32.xlu0 %v875, 32
        %v1470 = vpop.permute.xlu0 %1469
        %v1473 = vsel %vm958, %v1468, 0
        %1475 = vmatprep.subr.mxu0 0.0
        %1476 = vmatpush1.msra.mxu0 %v1470
        %1477 = vmatprep.subr.mxu0 0.0
        %1478 = vmatpush1.msra.mxu0 0.0
        %1479 = vmatprep.subr.mxu0 0.0
        %1480 = vmatpush1.msra.mxu0 0.0
        %1481 = vmatprep.subr.mxu0 0.0
        %1482 = vmatpush1.msra.mxu0 0.0
        %1483 = vmatprep.subr.mxu0 0.0
        %1484 = vmatpush1.msra.mxu0 0.0
        %1485 = vmatprep.subr.mxu0 0.0
        %1486 = vmatpush1.msra.mxu0 0.0
        %1487 = vmatprep.subr.mxu0 0.0
        %1488 = vmatpush1.msra.mxu0 0.0
        %1489 = vmatprep.subr.mxu0 0.0
        %1490 = vmatpush1.msra.mxu0 0.0
        %1491 = vmatprep.subr.mxu0 0.0
        %1492 = vmatpush1.msra.mxu0 0.0
        %1493 = vmatprep.subr.mxu0 0.0
        %1494 = vmatpush1.msra.mxu0 0.0
        %1495 = vmatprep.subr.mxu0 0.0
        %1496 = vmatpush1.msra.mxu0 0.0
        %1497 = vmatprep.subr.mxu0 0.0
        %1498 = vmatpush1.msra.mxu0 0.0
        %1499 = vmatprep.subr.mxu0 0.0
        %1500 = vmatpush1.msra.mxu0 0.0
        %1501 = vmatprep.subr.mxu0 0.0
        %1502 = vmatpush1.msra.mxu0 0.0
        %1503 = vmatprep.subr.mxu0 0.0
        %1504 = vmatpush1.msra.mxu0 0.0
        %1505 = vmatprep.subr.mxu0 0.0
        %1506 = vmatpush1.msra.mxu0 0.0
        %1507 = vmatprep.subr.mxu0 0.0
        %1508 = vmatpush1.msra.mxu0 0.0
        %1509 = vmatprep.subr.mxu0 0.0
        %1510 = vmatpush1.msra.mxu0 0.0
        %1511 = vmatprep.subr.mxu0 0.0
        %1512 = vmatpush1.msra.mxu0 0.0
        %1513 = vmatprep.subr.mxu0 0.0
        %1514 = vmatpush1.msra.mxu0 0.0
        %1515 = vmatprep.subr.mxu0 0.0
        %1516 = vmatpush1.msra.mxu0 0.0
        %1517 = vmatprep.subr.mxu0 0.0
        %1518 = vmatpush1.msra.mxu0 0.0
        %1519 = vmatprep.subr.mxu0 0.0
        %1520 = vmatpush1.msra.mxu0 0.0
        %1521 = vmatprep.subr.mxu0 0.0
        %1522 = vmatpush1.msra.mxu0 0.0
        %1523 = vmatprep.subr.mxu0 0.0
        %1524 = vmatpush1.msra.mxu0 0.0
        %1525 = vmatprep.subr.mxu0 0.0
        %1526 = vmatpush1.msra.mxu0 0.0
        %1527 = vmatprep.subr.mxu0 0.0
        %1528 = vmatpush1.msra.mxu0 0.0
        %1529 = vmatprep.subr.mxu0 0.0
        %1530 = vmatpush1.msra.mxu0 0.0
        %1531 = vmatprep.subr.mxu0 0.0
        %1532 = vmatpush1.msra.mxu0 0.0
        %1533 = vmatprep.subr.mxu0 0.0
        %1534 = vmatpush1.msra.mxu0 0.0
        %1535 = vmatprep.subr.mxu0 0.0
        %1536 = vmatpush1.msra.mxu0 0.0
        %1537 = vmatprep.subr.mxu0 0.0
        %1538 = vmatpush1.msra.mxu0 0.0
        %1539 = vmatprep.mubr.f32.mxu0 0.0
        %1540 = vmatmul.mubr.f32.gmra.mrb[0].mxu0 %v1473
        %v1541 = vpop.f32.mrb[0].mxu0
        %v1542 = vadd.f32 0.0, %v1541
        %v1543 = vpop.f32.mrb[0].mxu0
        %1544 = vdwg.mxu0
        %1546 = vrot.lane.b32.xlu0 %v1208, 32
        %v1547 = vpop.permute.xlu0 %1546
        %1550 = vrot.lane.b32.xlu0 %v1375, 64
        %v1551 = vpop.permute.xlu0 %1550
        %1554 = vrot.lane.b32.xlu0 %v1542, 96
        %v1555 = vpop.permute.xlu0 %1554
        %v1557 = vsel %vm878, %v1040, %v1547
        %vm1558 = vcmask 523264
        %v1559 = vsel %vm1558, %v1557, %v1551
        %vm1560 = vcmask 785408
        %v1561 = vsel %vm1560, %v1559, %v1555
        %v1562 = vld [vmem:[#allocation14] sm:$0xff]
        %v1563 = vld [vmem:[#allocation14 + $0x8] sm:$0xff]
        %v1564 = vld [vmem:[#allocation14 + $0x10] sm:$0xff]
        %v1565 = vld [vmem:[#allocation14 + $0x18] sm:$0xff]
        %v1566 = vld [vmem:[#allocation14 + $0x20] sm:$0xff]
        %v1567 = vld [vmem:[#allocation14 + $0x28] sm:$0xff]
        %v1568 = vld [vmem:[#allocation14 + $0x30] sm:$0xff]
        %v1569 = vld [vmem:[#allocation14 + $0x38] sm:$0xff]
        %v1570 = vld [vmem:[#allocation14 + $0x40] sm:$0xff]
        %v1571 = vld [vmem:[#allocation14 + $0x48] sm:$0xff]
        %v1572 = vld [vmem:[#allocation14 + $0x50] sm:$0xff]
        %v1573 = vld [vmem:[#allocation14 + $0x58] sm:$0xff]
        %v1574 = vld [vmem:[#allocation14 + $0x60] sm:$0xff]
        %v1575 = vld [vmem:[#allocation14 + $0x68] sm:$0xff]
        %v1576 = vld [vmem:[#allocation14 + $0x70] sm:$0xff]
        %v1577 = vld [vmem:[#allocation14 + $0x78] sm:$0xff]
        %v1578 = vld [vmem:[%s11] sm:$0x1]
        %v1580 = vlaneseq
        %v1581 = vshrl.u32 %v1580, 7
        %v1582 = vsub.s32 0, %v1581
        %v1583 = vrot.slane %v1578, %v1582
        %1585 = vmatprep.subr.mxu0 0.0
        %1586 = vmatpush1.msra.mxu0 %v1562
        %1587 = vmatprep.subr.mxu0 0.0
        %1588 = vmatpush1.msra.mxu0 %v1563
        %1589 = vmatprep.subr.mxu0 0.0
        %1590 = vmatpush1.msra.mxu0 %v1564
        %1591 = vmatprep.subr.mxu0 0.0
        %1592 = vmatpush1.msra.mxu0 %v1565
        %1593 = vmatprep.subr.mxu0 0.0
        %1594 = vmatpush1.msra.mxu0 %v1566
        %1595 = vmatprep.subr.mxu0 0.0
        %1596 = vmatpush1.msra.mxu0 %v1567
        %1597 = vmatprep.subr.mxu0 0.0
        %1598 = vmatpush1.msra.mxu0 %v1568
        %1599 = vmatprep.subr.mxu0 0.0
        %1600 = vmatpush1.msra.mxu0 %v1569
        %1601 = vmatprep.subr.mxu0 0.0
        %1602 = vmatpush1.msra.mxu0 %v1570
        %1603 = vmatprep.subr.mxu0 0.0
        %1604 = vmatpush1.msra.mxu0 %v1571
        %1605 = vmatprep.subr.mxu0 0.0
        %1606 = vmatpush1.msra.mxu0 %v1572
        %1607 = vmatprep.subr.mxu0 0.0
        %1608 = vmatpush1.msra.mxu0 %v1573
        %1609 = vmatprep.subr.mxu0 0.0
        %1610 = vmatpush1.msra.mxu0 %v1574
        %1611 = vmatprep.subr.mxu0 0.0
        %1612 = vmatpush1.msra.mxu0 %v1575
        %1613 = vmatprep.subr.mxu0 0.0
        %1614 = vmatpush1.msra.mxu0 %v1576
        %1615 = vmatprep.subr.mxu0 0.0
        %1616 = vmatpush1.msra.mxu0 %v1577
        %1617 = vmatprep.subr.mxu0 0.0
        %1618 = vmatpush1.msra.mxu0 0.0
        %1619 = vmatprep.subr.mxu0 0.0
        %1620 = vmatpush1.msra.mxu0 0.0
        %1621 = vmatprep.subr.mxu0 0.0
        %1622 = vmatpush1.msra.mxu0 0.0
        %1623 = vmatprep.subr.mxu0 0.0
        %1624 = vmatpush1.msra.mxu0 0.0
        %1625 = vmatprep.subr.mxu0 0.0
        %1626 = vmatpush1.msra.mxu0 0.0
        %1627 = vmatprep.subr.mxu0 0.0
        %1628 = vmatpush1.msra.mxu0 0.0
        %1629 = vmatprep.subr.mxu0 0.0
        %1630 = vmatpush1.msra.mxu0 0.0
        %1631 = vmatprep.subr.mxu0 0.0
        %1632 = vmatpush1.msra.mxu0 0.0
        %1633 = vmatprep.subr.mxu0 0.0
        %1634 = vmatpush1.msra.mxu0 0.0
        %1635 = vmatprep.subr.mxu0 0.0
        %1636 = vmatpush1.msra.mxu0 0.0
        %1637 = vmatprep.subr.mxu0 0.0
        %1638 = vmatpush1.msra.mxu0 0.0
        %1639 = vmatprep.subr.mxu0 0.0
        %1640 = vmatpush1.msra.mxu0 0.0
        %1641 = vmatprep.subr.mxu0 0.0
        %1642 = vmatpush1.msra.mxu0 0.0
        %1643 = vmatprep.subr.mxu0 0.0
        %1644 = vmatpush1.msra.mxu0 0.0
        %1645 = vmatprep.subr.mxu0 0.0
        %1646 = vmatpush1.msra.mxu0 0.0
        %1647 = vmatprep.subr.mxu0 0.0
        %1648 = vmatpush1.msra.mxu0 0.0
        %1649 = vmatprep.mubr.f32.mxu0 0.0
        %1650 = vmatmul.mubr.f32.gmra.mrb[0].mxu0 %v1561
        %v1651 = vpop.f32.mrb[0].mxu0
        %v1652 = vadd.f32 %v1583, %v1651
        %v1653 = vpop.f32.mrb[0].mxu0
        %1654 = vdwg.mxu0
        %1655 = vst [vmem:[%s594] sm:$0xff] %v1652
        %s1656 = sand.u32 %s317, 1
        %s1657 = scalar_lea.sflag [#allocation4], %s1656
        %s1658 = sand.u32 %s317, 1
        %s1659 = smul.addr %s1658, 8
        %s1660 = scalar_lea.vmem [#allocation16], %s1659
        // Predicated region
        $region101: #{tpu_custom_call.1} parent=67 // pred_check
          %p1661 = pneg %p327
        $region102: #{tpu_custom_call.1} parent=67 // pred_check_branch
          %1663 = sbr.rel (%p1661) target = $region104
        $region103: #{tpu_custom_call.1} parent=67 // pred_region
          %s1665 = ssub.s32 128, 128
          %1666 = vsyncadd %s1657, %s1665
          %s1667 = smul.addr %s37, 128
          %s1668 = scalar_lea.hbm %s12, %s1667
          %s1670 = sshll.u32 %s1660, 4
          %s1671 = int_to_ptr.vmem [resolvable:$true] %s1670
          %1673 = dma.vmem_to_hbm [thread:$0]  %s1671, 128, %s1668, %s1657
        $region104: #{tpu_custom_call.1} parent=67 // pred_fallthru
          _
      $region68: #{tpu_custom_call.1} parent=5 // pred_fallthru
        _
      %p1674 = scmp.le.s32.totalorder 2, %s32
      // Predicated region
      $region105: #{tpu_custom_call.1} parent=5 // pred_check
        %p1675 = pneg %p1674
      $region106: #{tpu_custom_call.1} parent=5 // pred_check_branch
        %1677 = sbr.rel (%p1675) target = $region108
      $region107: #{tpu_custom_call.1} parent=5 // pred_region
        %s1678 = ssub.s32 %s32, 2
        // Predicated region
        $region109: #{tpu_custom_call.1} parent=107 // pred_check
          %p1679 = pneg %p333
        $region110: #{tpu_custom_call.1} parent=107 // pred_check_branch
          %1681 = sbr.rel (%p1679) target = $region112
        $region111: #{tpu_custom_call.1} parent=107 // pred_region
          %s1682 = sand.u32 %s318, 1
          %s1683 = scalar_lea.sflag [#allocation4], %s1682
          %s1684 = sand.u32 %s318, 1
          %s1685 = smul.addr %s1684, 8
          %s1686 = scalar_lea.vmem [#allocation16], %s1685
          %1687 = dma.done %s1683, 128
        $region112: #{tpu_custom_call.1} parent=107 // pred_fallthru
          _
      $region108: #{tpu_custom_call.1} parent=5 // pred_fallthru
        _
    $region6: #{tpu_custom_call.1} parent=1 // loop_footer
      %s36 = sadd.s32 1, %s32
    $region7: #{tpu_custom_call.1} parent=1 // loop_footer_branch
      %31 = sbr.rel target = $region3
    $region8: #{tpu_custom_call.1} parent=1 // loop_exit
      _
    %1688 = vsyncpa [#allocation3], 1
    %s1689 = scalar_lea.sflag [#allocation3], 1
    %1690 = vsyncpa %s1689, 1
    %1691 = vsyncpa [#allocation6], 1
    %s1692 = scalar_lea.sflag [#allocation6], 1
    %1693 = vsyncpa %s1692, 1
    %1694 = vsyncpa [#allocation9], 1
    %s1695 = scalar_lea.sflag [#allocation9], 1
    %1696 = vsyncpa %s1695, 1
    %1697 = vsyncpa [#allocation12], 1
    %1698 = vsyncpa [#allocation15], 1
    %1699 = vsyncpa [#allocation4], 1
    %s1700 = scalar_lea.sflag [#allocation4], 1
    %1701 = vsyncpa %s1700, 1

</llo_original>
